<compile_context>
chip_gen: v7x
topology: tpu7x:2x2x1
jax: 0.10.0
libtpu: 0.0.40
codegen_flags: <defaults>
</compile_context>

<pallas_src>
import functools

import jax
import jax.numpy as jnp
from jax import lax
from jax.experimental import pallas as pl
from jax.experimental.pallas import tpu as pltpu

LN_EPS = 1e-5       # torch.nn.LayerNorm default eps
L2_EPS = 1e-12      # torch F.normalize default eps


# ----------------------------------------------------------------------------
# Fused Encoder kernel (one grid step = one batch tile of TM rows)
# ----------------------------------------------------------------------------
def _encoder_kernel(num_hidden, res_flags, *refs):
    x_ref, c_ref = refs[0], refs[1]
    o_ref = refs[-1]
    p = refs[2:-1]                      # flat parameter refs

    def ln_prelu(h, g_ref, be_ref, a_ref):
        mean = jnp.mean(h, axis=-1, keepdims=True)
        cent = h - mean
        var = jnp.mean(cent * cent, axis=-1, keepdims=True)
        hn = cent * lax.rsqrt(var + LN_EPS)
        hn = hn * g_ref[...] + be_ref[...]
        return jnp.where(hn > 0, hn, a_ref[...] * hn)   # single-alpha PReLU

    c_val = c_ref[...]
    x_val = x_ref[...]

    # --- layer 0: Linear(input_dim -> H0) + LayerNorm + PReLU (no cond) ---
    w0, b0, g0, be0, a0 = p[0:5]
    h = jnp.dot(x_val, w0[...], preferred_element_type=jnp.float32) + b0[...]
    x_cur = ln_prelu(h, g0, be0, a0)

    # --- hidden layers: concat-Linear as two dots + LN + PReLU (+residual) ---
    idx = 5
    for li in range(num_hidden - 1):
        wx, wc, b, g, be, a = p[idx:idx + 6]
        idx += 6
        h = (jnp.dot(x_cur, wx[...], preferred_element_type=jnp.float32)
             + jnp.dot(c_val, wc[...], preferred_element_type=jnp.float32)
             + b[...])
        z = ln_prelu(h, g, be, a)
        if res_flags[li]:
            z = z + x_cur
        x_cur = z

    # --- final CombineLinear(H_last + E -> latent_dim) ---
    wfx, wfc, bf = p[idx:idx + 3]
    y = (jnp.dot(x_cur, wfx[...], preferred_element_type=jnp.float32)
         + jnp.dot(c_val, wfc[...], preferred_element_type=jnp.float32)
         + bf[...])

    # --- F.normalize(y, p=2, dim=1) ---
    ss = jnp.sum(y * y, axis=-1, keepdims=True)
    o_ref[...] = y / jnp.maximum(jnp.sqrt(ss), L2_EPS)


# ----------------------------------------------------------------------------
# Wrapper: single pallas_call, batch grid, weights resident via const index_map
# ----------------------------------------------------------------------------
def encoder_forward(params, x, c, hidden_dim, residual=True, block_m=128):
    B, input_dim = x.shape
    E = c.shape[1]
    latent_dim = params["final"][0].shape[1]

    tm = max(8, min(block_m, B))           # batch tile (sublane multiple of 8)
    grid = (pl.cdiv(B, tm),)

    flat, in_specs = [], []

    def add_act(arr, block):               # tiled over the batch grid
        flat.append(arr)
        in_specs.append(pl.BlockSpec(block, lambda i: (i, 0)))

    def add_param(arr):                     # full block, constant index_map
        flat.append(arr)
        in_specs.append(pl.BlockSpec(arr.shape, lambda i: (0, 0)))

    add_act(x, (tm, input_dim))
    add_act(c, (tm, E))
    for arr in params["first"]:
        add_param(arr)
    for layer in params["hidden"]:
        for arr in layer:
            add_param(arr)
    for arr in params["final"]:
        add_param(arr)

    res_flags = tuple(bool(residual and hidden_dim[i - 1] == hidden_dim[i])
                      for i in range(1, len(hidden_dim)))
    kernel = functools.partial(_encoder_kernel, len(hidden_dim), res_flags)

    return pl.pallas_call(
        kernel,
        out_shape=jax.ShapeDtypeStruct((B, latent_dim), jnp.float32),
        grid=grid,
        in_specs=in_specs,
        out_specs=pl.BlockSpec((tm, latent_dim), lambda i: (i, 0)),
        compiler_params=pltpu.CompilerParams(
            dimension_semantics=("parallel",)),
    )(*flat)


# ----------------------------------------------------------------------------
# Parameter construction (torch-like uniform(-1/sqrt(fan_in), 1/sqrt(fan_in)))
# Concat-layer weights are stored pre-split:  W = [W_x ; W_c] by rows,
# each with shape (in, out) so   cat(x, c) @ W  ==  x @ W_x + c @ W_c.
# ----------------------------------------------------------------------------
def init_encoder_params(key, input_dim, latent_dim, hidden_dim, embed_dim):
    params = {"first": None, "hidden": [], "final": None}

    # first block: Linear(input_dim, H0) + LayerNorm + PReLU
    key, kw, kb = jax.random.split(key, 3)
    bound = 1.0 / (input_dim ** 0.5)
    w0 = jax.random.uniform(kw, (input_dim, hidden_dim[0]), jnp.float32,
                            -bound, bound)
    b0 = jax.random.uniform(kb, (1, hidden_dim[0]), jnp.float32, -bound, bound)
    g0 = jnp.ones((1, hidden_dim[0]), jnp.float32)
    be0 = jnp.zeros((1, hidden_dim[0]), jnp.float32)
    a0 = jnp.full((1, 1), 0.25, jnp.float32)     # torch PReLU default
    params["first"] = (w0, b0, g0, be0, a0)

    # hidden blocks: HiddenLayer(H_{i-1}, E, H_i)
    for i in range(1, len(hidden_dim)):
        key, kwx, kwc, kb = jax.random.split(key, 4)
        din = hidden_dim[i - 1] + embed_dim
        bound = 1.0 / (din ** 0.5)
        wx = jax.random.uniform(kwx, (hidden_dim[i - 1], hidden_dim[i]),
                                jnp.float32, -bound, bound)
        wc = jax.random.uniform(kwc, (embed_dim, hidden_dim[i]),
                                jnp.float32, -bound, bound)
        b = jax.random.uniform(kb, (1, hidden_dim[i]), jnp.float32,
                               -bound, bound)
        g = jnp.ones((1, hidden_dim[i]), jnp.float32)
        be = jnp.zeros((1, hidden_dim[i]), jnp.float32)
        a = jnp.full((1, 1), 0.25, jnp.float32)
        params["hidden"].append((wx, wc, b, g, be, a))

    # final CombineLinear(H_last, E, latent_dim)
    key, kwx, kwc, kb = jax.random.split(key, 4)
    din = hidden_dim[-1] + embed_dim
    bound = 1.0 / (din ** 0.5)
    wfx = jax.random.uniform(kwx, (hidden_dim[-1], latent_dim), jnp.float32,
                             -bound, bound)
    wfc = jax.random.uniform(kwc, (embed_dim, latent_dim), jnp.float32,
                             -bound, bound)
    bf = jax.random.uniform(kb, (1, latent_dim), jnp.float32, -bound, bound)
    params["final"] = (wfx, wfc, bf)
    return params


# ----------------------------------------------------------------------------
# Pure-JAX reference (mirrors the PyTorch Encoder.forward, using concat)
# ----------------------------------------------------------------------------
def encoder_reference(params, x, c, hidden_dim, residual=True):
    def ln_prelu(h, g, be, a):
        mean = jnp.mean(h, axis=-1, keepdims=True)
        var = jnp.mean((h - mean) ** 2, axis=-1, keepdims=True)
        hn = (h - mean) / jnp.sqrt(var + LN_EPS) * g + be
        return jnp.where(hn > 0, hn, a * hn)

    w0, b0, g0, be0, a0 = params["first"]
    x_cur = ln_prelu(x @ w0 + b0, g0, be0, a0)
    for i in range(1, len(hidden_dim)):
        wx, wc, b, g, be, a = params["hidden"][i - 1]
        w = jnp.concatenate([wx, wc], axis=0)
        h = jnp.concatenate([x_cur, c], axis=1) @ w + b
        z = ln_prelu(h, g, be, a)
        if residual and hidden_dim[i - 1] == hidden_dim[i]:
            z = z + x_cur
        x_cur = z
    wfx, wfc, bf = params["final"]
    wf = jnp.concatenate([wfx, wfc], axis=0)
    y = jnp.concatenate([x_cur, c], axis=1) @ wf + bf
    n = jnp.sqrt(jnp.sum(y * y, axis=1, keepdims=True))
    return y / jnp.maximum(n, L2_EPS)


if __name__ == "__main__":
    # Small shapes consistent with the module (defaults scaled down):
    # equal hidden widths -> residual path exercised; latent=128 is lane-dense.
    B = 16
    input_dim = 64
    latent_dim = 128
    embed_dim = 64
    hidden_dim = [128, 128]

    key = jax.random.PRNGKey(0)
    kp, kx, kc = jax.random.split(key, 3)
    params = init_encoder_params(kp, input_dim, latent_dim, hidden_dim,
                                 embed_dim)
    x = jax.random.normal(kx, (B, input_dim), jnp.float32)
    c = jax.random.normal(kc, (B, embed_dim), jnp.float32)

    out = encoder_forward(params, x, c, hidden_dim, residual=True, block_m=8)
    out = jax.block_until_ready(out)

    ref = encoder_reference(params, x, c, hidden_dim, residual=True)
    assert out.shape == (B, latent_dim)
    assert jnp.allclose(out, ref, atol=1e-4, rtol=1e-4), \
        float(jnp.max(jnp.abs(out - ref)))

    print("KERNEL_OK")
</pallas_src>

<mosaic_0001>
module attributes {stable_mosaic.version = 11 : i64} {
  func.func @_encoder_kernel(%arg0: i32, %arg1: memref<8x64xf32, #tpu.memory_space<vmem>>, %arg2: memref<8x64xf32, #tpu.memory_space<vmem>>, %arg3: memref<64x128xf32, #tpu.memory_space<vmem>>, %arg4: memref<1x128xf32, #tpu.memory_space<vmem>>, %arg5: memref<1x128xf32, #tpu.memory_space<vmem>>, %arg6: memref<1x128xf32, #tpu.memory_space<vmem>>, %arg7: memref<1x1xf32, #tpu.memory_space<vmem>>, %arg8: memref<128x128xf32, #tpu.memory_space<vmem>>, %arg9: memref<64x128xf32, #tpu.memory_space<vmem>>, %arg10: memref<1x128xf32, #tpu.memory_space<vmem>>, %arg11: memref<1x128xf32, #tpu.memory_space<vmem>>, %arg12: memref<1x128xf32, #tpu.memory_space<vmem>>, %arg13: memref<1x1xf32, #tpu.memory_space<vmem>>, %arg14: memref<128x128xf32, #tpu.memory_space<vmem>>, %arg15: memref<64x128xf32, #tpu.memory_space<vmem>>, %arg16: memref<1x128xf32, #tpu.memory_space<vmem>>, %arg17: memref<8x128xf32, #tpu.memory_space<vmem>>) attributes {dimension_semantics = [#tpu.dimension_semantics<parallel>], iteration_bounds = array<i64: 2>, scalar_prefetch = 0 : i64, scratch_operands = 0 : i64, tpu.core_type = #tpu.core_type<tc>, window_params = [{transform_indices = @transform_0, window_bounds = array<i64: 8, 64>}, {transform_indices = @transform_1, window_bounds = array<i64: 8, 64>}, {pipeline_mode = #tpu.pipeline_mode<synchronous>, transform_indices = @transform_2, window_bounds = array<i64: 64, 128>}, {pipeline_mode = #tpu.pipeline_mode<synchronous>, transform_indices = @transform_3, window_bounds = array<i64: 1, 128>}, {pipeline_mode = #tpu.pipeline_mode<synchronous>, transform_indices = @transform_4, window_bounds = array<i64: 1, 128>}, {pipeline_mode = #tpu.pipeline_mode<synchronous>, transform_indices = @transform_5, window_bounds = array<i64: 1, 128>}, {pipeline_mode = #tpu.pipeline_mode<synchronous>, transform_indices = @transform_6, window_bounds = array<i64: 1, 1>}, {pipeline_mode = #tpu.pipeline_mode<synchronous>, transform_indices = @transform_7, window_bounds = array<i64: 128, 128>}, {pipeline_mode = #tpu.pipeline_mode<synchronous>, transform_indices = @transform_8, window_bounds = array<i64: 64, 128>}, {pipeline_mode = #tpu.pipeline_mode<synchronous>, transform_indices = @transform_9, window_bounds = array<i64: 1, 128>}, {pipeline_mode = #tpu.pipeline_mode<synchronous>, transform_indices = @transform_10, window_bounds = array<i64: 1, 128>}, {pipeline_mode = #tpu.pipeline_mode<synchronous>, transform_indices = @transform_11, window_bounds = array<i64: 1, 128>}, {pipeline_mode = #tpu.pipeline_mode<synchronous>, transform_indices = @transform_12, window_bounds = array<i64: 1, 1>}, {pipeline_mode = #tpu.pipeline_mode<synchronous>, transform_indices = @transform_13, window_bounds = array<i64: 128, 128>}, {pipeline_mode = #tpu.pipeline_mode<synchronous>, transform_indices = @transform_14, window_bounds = array<i64: 64, 128>}, {pipeline_mode = #tpu.pipeline_mode<synchronous>, transform_indices = @transform_15, window_bounds = array<i64: 1, 128>}, {transform_indices = @transform_16, window_bounds = array<i64: 8, 128>}]} {
    %c0 = arith.constant 0 : index
    %c0_0 = arith.constant 0 : index
    %0 = vector.load %arg2[%c0, %c0_0] : memref<8x64xf32, #tpu.memory_space<vmem>>, vector<8x64xf32>
    %c0_1 = arith.constant 0 : index
    %c0_2 = arith.constant 0 : index
    %1 = vector.load %arg1[%c0_1, %c0_2] : memref<8x64xf32, #tpu.memory_space<vmem>>, vector<8x64xf32>
    %c0_3 = arith.constant 0 : index
    %c0_4 = arith.constant 0 : index
    %2 = vector.load %arg3[%c0_3, %c0_4] : memref<64x128xf32, #tpu.memory_space<vmem>>, vector<64x128xf32>
    %cst = arith.constant dense<0.000000e+00> : vector<8x128xf32>
    %3 = tpu.matmul %1, %2, %cst {dimension_numbers = #tpu.dot_dimension_numbers<[1], [0], [0], [1], [0, 0, 1, 1], [], []>} : vector<8x64xf32>, vector<64x128xf32>, vector<8x128xf32> -> vector<8x128xf32>
    %c0_5 = arith.constant 0 : index
    %c0_6 = arith.constant 0 : index
    %4 = vector.load %arg4[%c0_5, %c0_6] : memref<1x128xf32, #tpu.memory_space<vmem>>, vector<1x128xf32>
    %5 = vector.broadcast %4 : vector<1x128xf32> to vector<8x128xf32>
    %6 = arith.addf %3, %5 : vector<8x128xf32>
    %cst_7 = arith.constant dense<0.000000e+00> : vector<8xf32>
    %7 = vector.multi_reduction <add>, %6, %cst_7 [1] : vector<8x128xf32> to vector<8xf32>
    %8 = vector.shape_cast %7 : vector<8xf32> to vector<8x1xf32>
    %cst_8 = arith.constant 1.280000e+02 : f32
    %9 = vector.broadcast %cst_8 : f32 to vector<8x1xf32>
    %10 = arith.divf %8, %9 : vector<8x1xf32>
    %11 = vector.broadcast %10 : vector<8x1xf32> to vector<8x128xf32>
    %12 = arith.subf %6, %11 : vector<8x128xf32>
    %13 = arith.mulf %12, %12 : vector<8x128xf32>
    %cst_9 = arith.constant dense<0.000000e+00> : vector<8xf32>
    %14 = vector.multi_reduction <add>, %13, %cst_9 [1] : vector<8x128xf32> to vector<8xf32>
    %15 = vector.shape_cast %14 : vector<8xf32> to vector<8x1xf32>
    %cst_10 = arith.constant 1.280000e+02 : f32
    %16 = vector.broadcast %cst_10 : f32 to vector<8x1xf32>
    %17 = arith.divf %15, %16 : vector<8x1xf32>
    %cst_11 = arith.constant 9.99999974E-6 : f32
    %18 = vector.broadcast %cst_11 : f32 to vector<8x1xf32>
    %19 = arith.addf %17, %18 : vector<8x1xf32>
    %20 = math.rsqrt %19 : vector<8x1xf32>
    %21 = vector.broadcast %20 : vector<8x1xf32> to vector<8x128xf32>
    %22 = arith.mulf %12, %21 : vector<8x128xf32>
    %c0_12 = arith.constant 0 : index
    %c0_13 = arith.constant 0 : index
    %23 = vector.load %arg5[%c0_12, %c0_13] : memref<1x128xf32, #tpu.memory_space<vmem>>, vector<1x128xf32>
    %24 = vector.broadcast %23 : vector<1x128xf32> to vector<8x128xf32>
    %25 = arith.mulf %22, %24 : vector<8x128xf32>
    %c0_14 = arith.constant 0 : index
    %c0_15 = arith.constant 0 : index
    %26 = vector.load %arg6[%c0_14, %c0_15] : memref<1x128xf32, #tpu.memory_space<vmem>>, vector<1x128xf32>
    %27 = vector.broadcast %26 : vector<1x128xf32> to vector<8x128xf32>
    %28 = arith.addf %25, %27 : vector<8x128xf32>
    %cst_16 = arith.constant 0.000000e+00 : f32
    %29 = vector.broadcast %cst_16 : f32 to vector<8x128xf32>
    %30 = arith.cmpf ogt, %28, %29 : vector<8x128xf32>
    %c0_17 = arith.constant 0 : index
    %c0_18 = arith.constant 0 : index
    %31 = vector.load %arg7[%c0_17, %c0_18] : memref<1x1xf32, #tpu.memory_space<vmem>>, vector<1x1xf32>
    %32 = vector.broadcast %31 : vector<1x1xf32> to vector<8x128xf32>
    %33 = arith.mulf %32, %28 : vector<8x128xf32>
    %34 = arith.select %30, %28, %33 : vector<8x128xi1>, vector<8x128xf32>
    %c0_19 = arith.constant 0 : index
    %c0_20 = arith.constant 0 : index
    %35 = vector.load %arg8[%c0_19, %c0_20] : memref<128x128xf32, #tpu.memory_space<vmem>>, vector<128x128xf32>
    %cst_21 = arith.constant dense<0.000000e+00> : vector<8x128xf32>
    %36 = tpu.matmul %34, %35, %cst_21 {dimension_numbers = #tpu.dot_dimension_numbers<[1], [0], [0], [1], [0, 0, 1, 1], [], []>} : vector<8x128xf32>, vector<128x128xf32>, vector<8x128xf32> -> vector<8x128xf32>
    %c0_22 = arith.constant 0 : index
    %c0_23 = arith.constant 0 : index
    %37 = vector.load %arg9[%c0_22, %c0_23] : memref<64x128xf32, #tpu.memory_space<vmem>>, vector<64x128xf32>
    %cst_24 = arith.constant dense<0.000000e+00> : vector<8x128xf32>
    %38 = tpu.matmul %0, %37, %cst_24 {dimension_numbers = #tpu.dot_dimension_numbers<[1], [0], [0], [1], [0, 0, 1, 1], [], []>} : vector<8x64xf32>, vector<64x128xf32>, vector<8x128xf32> -> vector<8x128xf32>
    %39 = arith.addf %36, %38 : vector<8x128xf32>
    %c0_25 = arith.constant 0 : index
    %c0_26 = arith.constant 0 : index
    %40 = vector.load %arg10[%c0_25, %c0_26] : memref<1x128xf32, #tpu.memory_space<vmem>>, vector<1x128xf32>
    %41 = vector.broadcast %40 : vector<1x128xf32> to vector<8x128xf32>
    %42 = arith.addf %39, %41 : vector<8x128xf32>
    %cst_27 = arith.constant dense<0.000000e+00> : vector<8xf32>
    %43 = vector.multi_reduction <add>, %42, %cst_27 [1] : vector<8x128xf32> to vector<8xf32>
    %44 = vector.shape_cast %43 : vector<8xf32> to vector<8x1xf32>
    %cst_28 = arith.constant 1.280000e+02 : f32
    %45 = vector.broadcast %cst_28 : f32 to vector<8x1xf32>
    %46 = arith.divf %44, %45 : vector<8x1xf32>
    %47 = vector.broadcast %46 : vector<8x1xf32> to vector<8x128xf32>
    %48 = arith.subf %42, %47 : vector<8x128xf32>
    %49 = arith.mulf %48, %48 : vector<8x128xf32>
    %cst_29 = arith.constant dense<0.000000e+00> : vector<8xf32>
    %50 = vector.multi_reduction <add>, %49, %cst_29 [1] : vector<8x128xf32> to vector<8xf32>
    %51 = vector.shape_cast %50 : vector<8xf32> to vector<8x1xf32>
    %cst_30 = arith.constant 1.280000e+02 : f32
    %52 = vector.broadcast %cst_30 : f32 to vector<8x1xf32>
    %53 = arith.divf %51, %52 : vector<8x1xf32>
    %cst_31 = arith.constant 9.99999974E-6 : f32
    %54 = vector.broadcast %cst_31 : f32 to vector<8x1xf32>
    %55 = arith.addf %53, %54 : vector<8x1xf32>
    %56 = math.rsqrt %55 : vector<8x1xf32>
    %57 = vector.broadcast %56 : vector<8x1xf32> to vector<8x128xf32>
    %58 = arith.mulf %48, %57 : vector<8x128xf32>
    %c0_32 = arith.constant 0 : index
    %c0_33 = arith.constant 0 : index
    %59 = vector.load %arg11[%c0_32, %c0_33] : memref<1x128xf32, #tpu.memory_space<vmem>>, vector<1x128xf32>
    %60 = vector.broadcast %59 : vector<1x128xf32> to vector<8x128xf32>
    %61 = arith.mulf %58, %60 : vector<8x128xf32>
    %c0_34 = arith.constant 0 : index
    %c0_35 = arith.constant 0 : index
    %62 = vector.load %arg12[%c0_34, %c0_35] : memref<1x128xf32, #tpu.memory_space<vmem>>, vector<1x128xf32>
    %63 = vector.broadcast %62 : vector<1x128xf32> to vector<8x128xf32>
    %64 = arith.addf %61, %63 : vector<8x128xf32>
    %cst_36 = arith.constant 0.000000e+00 : f32
    %65 = vector.broadcast %cst_36 : f32 to vector<8x128xf32>
    %66 = arith.cmpf ogt, %64, %65 : vector<8x128xf32>
    %c0_37 = arith.constant 0 : index
    %c0_38 = arith.constant 0 : index
    %67 = vector.load %arg13[%c0_37, %c0_38] : memref<1x1xf32, #tpu.memory_space<vmem>>, vector<1x1xf32>
    %68 = vector.broadcast %67 : vector<1x1xf32> to vector<8x128xf32>
    %69 = arith.mulf %68, %64 : vector<8x128xf32>
    %70 = arith.select %66, %64, %69 : vector<8x128xi1>, vector<8x128xf32>
    %71 = arith.addf %70, %34 : vector<8x128xf32>
    %c0_39 = arith.constant 0 : index
    %c0_40 = arith.constant 0 : index
    %72 = vector.load %arg14[%c0_39, %c0_40] : memref<128x128xf32, #tpu.memory_space<vmem>>, vector<128x128xf32>
    %cst_41 = arith.constant dense<0.000000e+00> : vector<8x128xf32>
    %73 = tpu.matmul %71, %72, %cst_41 {dimension_numbers = #tpu.dot_dimension_numbers<[1], [0], [0], [1], [0, 0, 1, 1], [], []>} : vector<8x128xf32>, vector<128x128xf32>, vector<8x128xf32> -> vector<8x128xf32>
    %c0_42 = arith.constant 0 : index
    %c0_43 = arith.constant 0 : index
    %74 = vector.load %arg15[%c0_42, %c0_43] : memref<64x128xf32, #tpu.memory_space<vmem>>, vector<64x128xf32>
    %cst_44 = arith.constant dense<0.000000e+00> : vector<8x128xf32>
    %75 = tpu.matmul %0, %74, %cst_44 {dimension_numbers = #tpu.dot_dimension_numbers<[1], [0], [0], [1], [0, 0, 1, 1], [], []>} : vector<8x64xf32>, vector<64x128xf32>, vector<8x128xf32> -> vector<8x128xf32>
    %76 = arith.addf %73, %75 : vector<8x128xf32>
    %c0_45 = arith.constant 0 : index
    %c0_46 = arith.constant 0 : index
    %77 = vector.load %arg16[%c0_45, %c0_46] : memref<1x128xf32, #tpu.memory_space<vmem>>, vector<1x128xf32>
    %78 = vector.broadcast %77 : vector<1x128xf32> to vector<8x128xf32>
    %79 = arith.addf %76, %78 : vector<8x128xf32>
    %80 = arith.mulf %79, %79 : vector<8x128xf32>
    %cst_47 = arith.constant dense<0.000000e+00> : vector<8xf32>
    %81 = vector.multi_reduction <add>, %80, %cst_47 [1] : vector<8x128xf32> to vector<8xf32>
    %82 = vector.shape_cast %81 : vector<8xf32> to vector<8x1xf32>
    %83 = math.sqrt %82 : vector<8x1xf32>
    %cst_48 = arith.constant 9.99999996E-13 : f32
    %84 = vector.broadcast %cst_48 : f32 to vector<8x1xf32>
    %85 = arith.maximumf %83, %84 : vector<8x1xf32>
    %86 = vector.broadcast %85 : vector<8x1xf32> to vector<8x128xf32>
    %87 = arith.divf %79, %86 : vector<8x128xf32>
    %c0_49 = arith.constant 0 : index
    %c0_50 = arith.constant 0 : index
    %88 = vector.load %arg17[%c0_49, %c0_50] : memref<8x128xf32, #tpu.memory_space<vmem>>, vector<8x128xf32>
    tpu.vector_store %arg17[%c0_49, %c0_50], %87 {strides = array<i32>} : memref<8x128xf32, #tpu.memory_space<vmem>>, vector<8x128xf32>,
    return
  }
  func.func @transform_0(%arg0: i32) -> (i32, i32) {
    %c0_i32 = arith.constant 0 : i32
    %c0_i32_0 = arith.constant 0 : i32
    return %arg0, %c0_i32 : i32, i32
  }
  func.func @transform_1(%arg0: i32) -> (i32, i32) {
    %c0_i32 = arith.constant 0 : i32
    %c0_i32_0 = arith.constant 0 : i32
    return %arg0, %c0_i32 : i32, i32
  }
  func.func @transform_2(%arg0: i32) -> (i32, i32) {
    %c0_i32 = arith.constant 0 : i32
    %c0_i32_0 = arith.constant 0 : i32
    %c0_i32_1 = arith.constant 0 : i32
    return %c0_i32, %c0_i32_0 : i32, i32
  }
  func.func @transform_3(%arg0: i32) -> (i32, i32) {
    %c0_i32 = arith.constant 0 : i32
    %c0_i32_0 = arith.constant 0 : i32
    %c0_i32_1 = arith.constant 0 : i32
    return %c0_i32, %c0_i32_0 : i32, i32
  }
  func.func @transform_4(%arg0: i32) -> (i32, i32) {
    %c0_i32 = arith.constant 0 : i32
    %c0_i32_0 = arith.constant 0 : i32
    %c0_i32_1 = arith.constant 0 : i32
    return %c0_i32, %c0_i32_0 : i32, i32
  }
  func.func @transform_5(%arg0: i32) -> (i32, i32) {
    %c0_i32 = arith.constant 0 : i32
    %c0_i32_0 = arith.constant 0 : i32
    %c0_i32_1 = arith.constant 0 : i32
    return %c0_i32, %c0_i32_0 : i32, i32
  }
  func.func @transform_6(%arg0: i32) -> (i32, i32) {
    %c0_i32 = arith.constant 0 : i32
    %c0_i32_0 = arith.constant 0 : i32
    %c0_i32_1 = arith.constant 0 : i32
    return %c0_i32, %c0_i32_0 : i32, i32
  }
  func.func @transform_7(%arg0: i32) -> (i32, i32) {
    %c0_i32 = arith.constant 0 : i32
    %c0_i32_0 = arith.constant 0 : i32
    %c0_i32_1 = arith.constant 0 : i32
    return %c0_i32, %c0_i32_0 : i32, i32
  }
  func.func @transform_8(%arg0: i32) -> (i32, i32) {
    %c0_i32 = arith.constant 0 : i32
    %c0_i32_0 = arith.constant 0 : i32
    %c0_i32_1 = arith.constant 0 : i32
    return %c0_i32, %c0_i32_0 : i32, i32
  }
  func.func @transform_9(%arg0: i32) -> (i32, i32) {
    %c0_i32 = arith.constant 0 : i32
    %c0_i32_0 = arith.constant 0 : i32
    %c0_i32_1 = arith.constant 0 : i32
    return %c0_i32, %c0_i32_0 : i32, i32
  }
  func.func @transform_10(%arg0: i32) -> (i32, i32) {
    %c0_i32 = arith.constant 0 : i32
    %c0_i32_0 = arith.constant 0 : i32
    %c0_i32_1 = arith.constant 0 : i32
    return %c0_i32, %c0_i32_0 : i32, i32
  }
  func.func @transform_11(%arg0: i32) -> (i32, i32) {
    %c0_i32 = arith.constant 0 : i32
    %c0_i32_0 = arith.constant 0 : i32
    %c0_i32_1 = arith.constant 0 : i32
    return %c0_i32, %c0_i32_0 : i32, i32
  }
  func.func @transform_12(%arg0: i32) -> (i32, i32) {
    %c0_i32 = arith.constant 0 : i32
    %c0_i32_0 = arith.constant 0 : i32
    %c0_i32_1 = arith.constant 0 : i32
    return %c0_i32, %c0_i32_0 : i32, i32
  }
  func.func @transform_13(%arg0: i32) -> (i32, i32) {
    %c0_i32 = arith.constant 0 : i32
    %c0_i32_0 = arith.constant 0 : i32
    %c0_i32_1 = arith.constant 0 : i32
    return %c0_i32, %c0_i32_0 : i32, i32
  }
  func.func @transform_14(%arg0: i32) -> (i32, i32) {
    %c0_i32 = arith.constant 0 : i32
    %c0_i32_0 = arith.constant 0 : i32
    %c0_i32_1 = arith.constant 0 : i32
    return %c0_i32, %c0_i32_0 : i32, i32
  }
  func.func @transform_15(%arg0: i32) -> (i32, i32) {
    %c0_i32 = arith.constant 0 : i32
    %c0_i32_0 = arith.constant 0 : i32
    %c0_i32_1 = arith.constant 0 : i32
    return %c0_i32, %c0_i32_0 : i32, i32
  }
  func.func @transform_16(%arg0: i32) -> (i32, i32) {
    %c0_i32 = arith.constant 0 : i32
    %c0_i32_0 = arith.constant 0 : i32
    return %arg0, %c0_i32 : i32, i32
  }
}

</mosaic_0001>

<llo_original>
// kernel: tpu_custom_call.1
$region0: #{tpu_custom_call.1}
  #allocation0 [shape = 'u32[]', space=smem, size = 0x4, offset = 0x4, fixed_abs, tag = 'smem constant byte address 0x4 - core index']
  #allocation1 [shape = 'u32[144,128]{1,0:T(1,128)}', space=vmem, size = 0x12000, scoped, tag = 'internal scratch']
  #allocation2 [shape = 'f32[1,1]{1,0:T(1,128)S(1)}', space=vmem, size = 0x200, scoped, tag = 'scoped memory for tpu_custom_call.1']
  #allocation3 [shape = 'f32[1,1]{1,0:T(1,128)S(1)}', space=vmem, size = 0x200, scoped, tag = 'scoped memory for tpu_custom_call.1']
  %s0 = inlined_call_operand.hbm [shape: f32[16,64], index: 0, kind: input, shape index: {}]
  %s1 = inlined_call_operand.hbm [shape: f32[16,64], index: 1, kind: input, shape index: {}]
  %s2 = inlined_call_operand.hbm [shape: f32[64,128], index: 2, kind: input, shape index: {}]
  %s3 = inlined_call_operand.vmem [shape: f32[1,128], index: 3, kind: input, shape index: {}]
  %s4 = inlined_call_operand.vmem [shape: f32[1,128], index: 4, kind: input, shape index: {}]
  %s5 = inlined_call_operand.vmem [shape: f32[1,128], index: 5, kind: input, shape index: {}]
  %s6 = inlined_call_operand.<no memory space> [shape: f32[1,1], index: 6, kind: input, shape index: {}]
  %s7 = inlined_call_operand.hbm [shape: f32[128,128], index: 7, kind: input, shape index: {}]
  %s8 = inlined_call_operand.hbm [shape: f32[64,128], index: 8, kind: input, shape index: {}]
  %s9 = inlined_call_operand.vmem [shape: f32[1,128], index: 9, kind: input, shape index: {}]
  %s10 = inlined_call_operand.vmem [shape: f32[1,128], index: 10, kind: input, shape index: {}]
  %s11 = inlined_call_operand.vmem [shape: f32[1,128], index: 11, kind: input, shape index: {}]
  %s12 = inlined_call_operand.<no memory space> [shape: f32[1,1], index: 12, kind: input, shape index: {}]
  %s13 = inlined_call_operand.hbm [shape: f32[128,128], index: 13, kind: input, shape index: {}]
  %s14 = inlined_call_operand.hbm [shape: f32[64,128], index: 14, kind: input, shape index: {}]
  %s15 = inlined_call_operand.vmem [shape: f32[1,128], index: 15, kind: input, shape index: {}]
  %s16 = inlined_call_operand.hbm [shape: f32[16,128], index: 16, kind: output, shape index: {}]
  %s17 = sld [smem:[#allocation0]]
  $region125: #{tpu_custom_call.1} parent=0
    _
  %s19 = ssub.s32 1, %s17
  %s20 = scalar_select 0, %s19, %s17
  %v21 = vstv %s6
  %22 = vst [vmem:[#allocation2] sm:$0x1] %v21
  %v23 = vstv %s12
  %24 = vst [vmem:[#allocation3] sm:$0x1] %v23
  $region1: #{tpu_custom_call.1} parent=0
    #allocation4 [shape = 'u8[8192]{0}', space=vmem, size = 0x2000, scoped, tag = 'input window, operand 0']
    #allocation5 [shape = 's32[2]{0}', space=sflag, size = 0x8, scoped, tag = 'scoped memory for tpu_custom_call.1']
    #allocation6 [shape = 's32[2]{0}', space=sflag, size = 0x8, scoped, tag = 'scoped memory for tpu_custom_call.1']
    #allocation7 [shape = 'u8[8192]{0}', space=vmem, size = 0x2000, scoped, tag = 'input window, operand 1']
    #allocation8 [shape = 's32[2]{0}', space=sflag, size = 0x8, scoped, tag = 'scoped memory for tpu_custom_call.1']
    #allocation9 [shape = 'u8[32768]{0}', space=vmem, size = 0x8000, scoped, tag = 'input window, operand 2, single buffered']
    #allocation10 [shape = 'u8[65536]{0}', space=vmem, size = 0x10000, scoped, tag = 'input window, operand 7, single buffered']
    #allocation11 [shape = 's32[1]{0}', space=sflag, size = 0x4, scoped, tag = 'scoped memory for tpu_custom_call.1']
    #allocation12 [shape = 'u8[32768]{0}', space=vmem, size = 0x8000, scoped, tag = 'input window, operand 8, single buffered']
    #allocation13 [shape = 'u8[65536]{0}', space=vmem, size = 0x10000, scoped, tag = 'input window, operand 13, single buffered']
    #allocation14 [shape = 's32[1]{0}', space=sflag, size = 0x4, scoped, tag = 'scoped memory for tpu_custom_call.1']
    #allocation15 [shape = 'u8[32768]{0}', space=vmem, size = 0x8000, scoped, tag = 'input window, operand 14, single buffered']
    #allocation16 [shape = 'u8[8192]{0}', space=vmem, size = 0x2000, scoped, tag = 'output window, operand 0']
    %25 = vsyncpa [#allocation5], 0
    %s26 = scalar_lea.sflag [#allocation5], 1
    %27 = vsyncpa %s26, 0
    %28 = vsyncpa [#allocation8], 0
    %s29 = scalar_lea.sflag [#allocation8], 1
    %30 = vsyncpa %s29, 0
    %31 = vsyncpa [#allocation11], 0
    %32 = vsyncpa [#allocation14], 0
    %33 = vsyncpa [#allocation6], 0
    %s34 = scalar_lea.sflag [#allocation6], 1
    %35 = vsyncpa %s34, 0
    loop: start=0, step=1, limit=4
    $region2: #{tpu_custom_call.1} parent=1 // loop_pre_header
      _
    $region3: #{tpu_custom_call.1} parent=1 // loop_header
      %s37 = sphi 0, %s41
      %p38 = scmp.ge.s32.totalorder %s37, 4
      %s47 = sphi 0, %s49
      %s50 = sphi 0, %s47
      %s51 = sphi 0, %s50
      %s67 = sphi 0, %s51
      %s73 = sphi 0, %s75
      %s76 = sphi 0, %s73
      %s77 = sphi 0, %s76
      %s93 = sphi 0, %s77
      %s97 = sphi 0, %s97
      %s99 = sphi 0, %s97
      %s100 = sphi 0, %s99
      %s114 = sphi 0, %s100
      %s118 = sphi 0, %s118
      %s120 = sphi 0, %s118
      %s121 = sphi 0, %s120
      %s135 = sphi 0, %s121
      %s139 = sphi 0, %s139
      %s141 = sphi 0, %s139
      %s142 = sphi 0, %s141
      %s156 = sphi 0, %s142
      %s160 = sphi 0, %s160
      %s162 = sphi 0, %s160
      %s163 = sphi 0, %s162
      %s177 = sphi 0, %s163
      %s181 = sphi 0, %s181
      %s183 = sphi 0, %s181
      %s184 = sphi 0, %s183
      %s198 = sphi 0, %s184
      %s202 = sphi 0, %s202
      %s204 = sphi 0, %s202
      %s205 = sphi 0, %s204
      %s219 = sphi 0, %s205
      %s223 = sphi 0, %s223
      %s225 = sphi 0, %s223
      %s226 = sphi 0, %s225
      %s240 = sphi 0, %s226
      %s244 = sphi 0, %s244
      %s246 = sphi 0, %s244
      %s247 = sphi 0, %s246
      %s261 = sphi 0, %s247
      %s265 = sphi 0, %s265
      %s267 = sphi 0, %s265
      %s268 = sphi 0, %s267
      %s282 = sphi 0, %s268
      %s286 = sphi 0, %s286
      %s288 = sphi 0, %s286
      %s289 = sphi 0, %s288
      %s303 = sphi 0, %s289
      %s307 = sphi 0, %s307
      %s309 = sphi 0, %s307
      %s310 = sphi 0, %s309
      %s324 = sphi 0, %s310
      %s328 = sphi 0, %s328
      %s330 = sphi 0, %s328
      %s331 = sphi 0, %s330
      %s345 = sphi 0, %s331
      %s349 = sphi 0, %s349
      %s351 = sphi 0, %s349
      %s352 = sphi 0, %s351
      %s366 = sphi 0, %s352
      %s370 = sphi 0, %s370
      %s372 = sphi 0, %s370
      %s373 = sphi 0, %s372
      %s387 = sphi 0, %s373
      %s393 = sphi 0, %s395
      %s396 = sphi 0, %s393
      %s397 = sphi 0, %s396
      %s413 = sphi 0, %s397
    $region4: #{tpu_custom_call.1} parent=1 // loop_header_branch
      %40 = sbr.rel (%p38) target = $region8
    $region5: #{tpu_custom_call.1} parent=1 // loop_body
      %s42 = ssub.s32 %s37, 1
      %s43 = ssub.s32 %s37, 2
      %s44 = sadd.s32 %s37, 1
      %s45 = ssub.s32 %s37, %s44
      %p46 = scmp.eq.s32.totalorder %s45, 0
      %s48 = sadd.s32 %s47, 1
      %s49 = scalar_select %p46, %s47, %s48
      %p52 = pneg %p46
      %p53 = scmp.eq.s32.totalorder %s37, 1
      %p54 = por %p52, %p53
      %p55 = scmp.ne.s32.totalorder %s47, %s50
      %p56 = scmp.eq.s32.totalorder %s37, 0
      %p57 = por %p55, %p56
      %p58 = scmp.ne.s32.totalorder %s47, %s50
      %p59 = scmp.eq.s32.totalorder %s42, 1
      %p60 = por %p58, %p59
      %p61 = scmp.ne.s32.totalorder %s50, %s51
      %p62 = scmp.eq.s32.totalorder %s42, 0
      %p63 = por %p61, %p62
      %p64 = scmp.ne.s32.totalorder %s50, %s51
      %p65 = scmp.eq.s32.totalorder %s43, 1
      %p66 = por %p64, %p65
      %p68 = scmp.ne.s32.totalorder %s51, %s67
      %p69 = scmp.eq.s32.totalorder %s43, 0
      %p70 = por %p68, %p69
      %s71 = ssub.s32 %s37, %s44
      %p72 = scmp.eq.s32.totalorder %s71, 0
      %s74 = sadd.s32 %s73, 1
      %s75 = scalar_select %p72, %s73, %s74
      %p78 = pneg %p72
      %p79 = scmp.eq.s32.totalorder %s37, 1
      %p80 = por %p78, %p79
      %p81 = scmp.ne.s32.totalorder %s73, %s76
      %p82 = scmp.eq.s32.totalorder %s37, 0
      %p83 = por %p81, %p82
      %p84 = scmp.ne.s32.totalorder %s73, %s76
      %p85 = scmp.eq.s32.totalorder %s42, 1
      %p86 = por %p84, %p85
      %p87 = scmp.ne.s32.totalorder %s76, %s77
      %p88 = scmp.eq.s32.totalorder %s42, 0
      %p89 = por %p87, %p88
      %p90 = scmp.ne.s32.totalorder %s76, %s77
      %p91 = scmp.eq.s32.totalorder %s43, 1
      %p92 = por %p90, %p91
      %p94 = scmp.ne.s32.totalorder %s77, %s93
      %p95 = scmp.eq.s32.totalorder %s43, 0
      %p96 = por %p94, %p95
      %s98 = sadd.s32 %s97, 1
      %p101 = scmp.eq.s32.totalorder %s37, 1
      %p102 = scmp.ne.s32.totalorder %s97, %s99
      %p103 = scmp.eq.s32.totalorder %s37, 0
      %p104 = por %p102, %p103
      %p105 = scmp.ne.s32.totalorder %s97, %s99
      %p106 = scmp.eq.s32.totalorder %s42, 1
      %p107 = por %p105, %p106
      %p108 = scmp.ne.s32.totalorder %s99, %s100
      %p109 = scmp.eq.s32.totalorder %s42, 0
      %p110 = por %p108, %p109
      %p111 = scmp.ne.s32.totalorder %s99, %s100
      %p112 = scmp.eq.s32.totalorder %s43, 1
      %p113 = por %p111, %p112
      %p115 = scmp.ne.s32.totalorder %s100, %s114
      %p116 = scmp.eq.s32.totalorder %s43, 0
      %p117 = por %p115, %p116
      %s119 = sadd.s32 %s118, 1
      %p122 = scmp.eq.s32.totalorder %s37, 1
      %p123 = scmp.ne.s32.totalorder %s118, %s120
      %p124 = scmp.eq.s32.totalorder %s37, 0
      %p125 = por %p123, %p124
      %p126 = scmp.ne.s32.totalorder %s118, %s120
      %p127 = scmp.eq.s32.totalorder %s42, 1
      %p128 = por %p126, %p127
      %p129 = scmp.ne.s32.totalorder %s120, %s121
      %p130 = scmp.eq.s32.totalorder %s42, 0
      %p131 = por %p129, %p130
      %p132 = scmp.ne.s32.totalorder %s120, %s121
      %p133 = scmp.eq.s32.totalorder %s43, 1
      %p134 = por %p132, %p133
      %p136 = scmp.ne.s32.totalorder %s121, %s135
      %p137 = scmp.eq.s32.totalorder %s43, 0
      %p138 = por %p136, %p137
      %s140 = sadd.s32 %s139, 1
      %p143 = scmp.eq.s32.totalorder %s37, 1
      %p144 = scmp.ne.s32.totalorder %s139, %s141
      %p145 = scmp.eq.s32.totalorder %s37, 0
      %p146 = por %p144, %p145
      %p147 = scmp.ne.s32.totalorder %s139, %s141
      %p148 = scmp.eq.s32.totalorder %s42, 1
      %p149 = por %p147, %p148
      %p150 = scmp.ne.s32.totalorder %s141, %s142
      %p151 = scmp.eq.s32.totalorder %s42, 0
      %p152 = por %p150, %p151
      %p153 = scmp.ne.s32.totalorder %s141, %s142
      %p154 = scmp.eq.s32.totalorder %s43, 1
      %p155 = por %p153, %p154
      %p157 = scmp.ne.s32.totalorder %s142, %s156
      %p158 = scmp.eq.s32.totalorder %s43, 0
      %p159 = por %p157, %p158
      %s161 = sadd.s32 %s160, 1
      %p164 = scmp.eq.s32.totalorder %s37, 1
      %p165 = scmp.ne.s32.totalorder %s160, %s162
      %p166 = scmp.eq.s32.totalorder %s37, 0
      %p167 = por %p165, %p166
      %p168 = scmp.ne.s32.totalorder %s160, %s162
      %p169 = scmp.eq.s32.totalorder %s42, 1
      %p170 = por %p168, %p169
      %p171 = scmp.ne.s32.totalorder %s162, %s163
      %p172 = scmp.eq.s32.totalorder %s42, 0
      %p173 = por %p171, %p172
      %p174 = scmp.ne.s32.totalorder %s162, %s163
      %p175 = scmp.eq.s32.totalorder %s43, 1
      %p176 = por %p174, %p175
      %p178 = scmp.ne.s32.totalorder %s163, %s177
      %p179 = scmp.eq.s32.totalorder %s43, 0
      %p180 = por %p178, %p179
      %s182 = sadd.s32 %s181, 1
      %p185 = scmp.eq.s32.totalorder %s37, 1
      %p186 = scmp.ne.s32.totalorder %s181, %s183
      %p187 = scmp.eq.s32.totalorder %s37, 0
      %p188 = por %p186, %p187
      %p189 = scmp.ne.s32.totalorder %s181, %s183
      %p190 = scmp.eq.s32.totalorder %s42, 1
      %p191 = por %p189, %p190
      %p192 = scmp.ne.s32.totalorder %s183, %s184
      %p193 = scmp.eq.s32.totalorder %s42, 0
      %p194 = por %p192, %p193
      %p195 = scmp.ne.s32.totalorder %s183, %s184
      %p196 = scmp.eq.s32.totalorder %s43, 1
      %p197 = por %p195, %p196
      %p199 = scmp.ne.s32.totalorder %s184, %s198
      %p200 = scmp.eq.s32.totalorder %s43, 0
      %p201 = por %p199, %p200
      %s203 = sadd.s32 %s202, 1
      %p206 = scmp.eq.s32.totalorder %s37, 1
      %p207 = scmp.ne.s32.totalorder %s202, %s204
      %p208 = scmp.eq.s32.totalorder %s37, 0
      %p209 = por %p207, %p208
      %p210 = scmp.ne.s32.totalorder %s202, %s204
      %p211 = scmp.eq.s32.totalorder %s42, 1
      %p212 = por %p210, %p211
      %p213 = scmp.ne.s32.totalorder %s204, %s205
      %p214 = scmp.eq.s32.totalorder %s42, 0
      %p215 = por %p213, %p214
      %p216 = scmp.ne.s32.totalorder %s204, %s205
      %p217 = scmp.eq.s32.totalorder %s43, 1
      %p218 = por %p216, %p217
      %p220 = scmp.ne.s32.totalorder %s205, %s219
      %p221 = scmp.eq.s32.totalorder %s43, 0
      %p222 = por %p220, %p221
      %s224 = sadd.s32 %s223, 1
      %p227 = scmp.eq.s32.totalorder %s37, 1
      %p228 = scmp.ne.s32.totalorder %s223, %s225
      %p229 = scmp.eq.s32.totalorder %s37, 0
      %p230 = por %p228, %p229
      %p231 = scmp.ne.s32.totalorder %s223, %s225
      %p232 = scmp.eq.s32.totalorder %s42, 1
      %p233 = por %p231, %p232
      %p234 = scmp.ne.s32.totalorder %s225, %s226
      %p235 = scmp.eq.s32.totalorder %s42, 0
      %p236 = por %p234, %p235
      %p237 = scmp.ne.s32.totalorder %s225, %s226
      %p238 = scmp.eq.s32.totalorder %s43, 1
      %p239 = por %p237, %p238
      %p241 = scmp.ne.s32.totalorder %s226, %s240
      %p242 = scmp.eq.s32.totalorder %s43, 0
      %p243 = por %p241, %p242
      %s245 = sadd.s32 %s244, 1
      %p248 = scmp.eq.s32.totalorder %s37, 1
      %p249 = scmp.ne.s32.totalorder %s244, %s246
      %p250 = scmp.eq.s32.totalorder %s37, 0
      %p251 = por %p249, %p250
      %p252 = scmp.ne.s32.totalorder %s244, %s246
      %p253 = scmp.eq.s32.totalorder %s42, 1
      %p254 = por %p252, %p253
      %p255 = scmp.ne.s32.totalorder %s246, %s247
      %p256 = scmp.eq.s32.totalorder %s42, 0
      %p257 = por %p255, %p256
      %p258 = scmp.ne.s32.totalorder %s246, %s247
      %p259 = scmp.eq.s32.totalorder %s43, 1
      %p260 = por %p258, %p259
      %p262 = scmp.ne.s32.totalorder %s247, %s261
      %p263 = scmp.eq.s32.totalorder %s43, 0
      %p264 = por %p262, %p263
      %s266 = sadd.s32 %s265, 1
      %p269 = scmp.eq.s32.totalorder %s37, 1
      %p270 = scmp.ne.s32.totalorder %s265, %s267
      %p271 = scmp.eq.s32.totalorder %s37, 0
      %p272 = por %p270, %p271
      %p273 = scmp.ne.s32.totalorder %s265, %s267
      %p274 = scmp.eq.s32.totalorder %s42, 1
      %p275 = por %p273, %p274
      %p276 = scmp.ne.s32.totalorder %s267, %s268
      %p277 = scmp.eq.s32.totalorder %s42, 0
      %p278 = por %p276, %p277
      %p279 = scmp.ne.s32.totalorder %s267, %s268
      %p280 = scmp.eq.s32.totalorder %s43, 1
      %p281 = por %p279, %p280
      %p283 = scmp.ne.s32.totalorder %s268, %s282
      %p284 = scmp.eq.s32.totalorder %s43, 0
      %p285 = por %p283, %p284
      %s287 = sadd.s32 %s286, 1
      %p290 = scmp.eq.s32.totalorder %s37, 1
      %p291 = scmp.ne.s32.totalorder %s286, %s288
      %p292 = scmp.eq.s32.totalorder %s37, 0
      %p293 = por %p291, %p292
      %p294 = scmp.ne.s32.totalorder %s286, %s288
      %p295 = scmp.eq.s32.totalorder %s42, 1
      %p296 = por %p294, %p295
      %p297 = scmp.ne.s32.totalorder %s288, %s289
      %p298 = scmp.eq.s32.totalorder %s42, 0
      %p299 = por %p297, %p298
      %p300 = scmp.ne.s32.totalorder %s288, %s289
      %p301 = scmp.eq.s32.totalorder %s43, 1
      %p302 = por %p300, %p301
      %p304 = scmp.ne.s32.totalorder %s289, %s303
      %p305 = scmp.eq.s32.totalorder %s43, 0
      %p306 = por %p304, %p305
      %s308 = sadd.s32 %s307, 1
      %p311 = scmp.eq.s32.totalorder %s37, 1
      %p312 = scmp.ne.s32.totalorder %s307, %s309
      %p313 = scmp.eq.s32.totalorder %s37, 0
      %p314 = por %p312, %p313
      %p315 = scmp.ne.s32.totalorder %s307, %s309
      %p316 = scmp.eq.s32.totalorder %s42, 1
      %p317 = por %p315, %p316
      %p318 = scmp.ne.s32.totalorder %s309, %s310
      %p319 = scmp.eq.s32.totalorder %s42, 0
      %p320 = por %p318, %p319
      %p321 = scmp.ne.s32.totalorder %s309, %s310
      %p322 = scmp.eq.s32.totalorder %s43, 1
      %p323 = por %p321, %p322
      %p325 = scmp.ne.s32.totalorder %s310, %s324
      %p326 = scmp.eq.s32.totalorder %s43, 0
      %p327 = por %p325, %p326
      %s329 = sadd.s32 %s328, 1
      %p332 = scmp.eq.s32.totalorder %s37, 1
      %p333 = scmp.ne.s32.totalorder %s328, %s330
      %p334 = scmp.eq.s32.totalorder %s37, 0
      %p335 = por %p333, %p334
      %p336 = scmp.ne.s32.totalorder %s328, %s330
      %p337 = scmp.eq.s32.totalorder %s42, 1
      %p338 = por %p336, %p337
      %p339 = scmp.ne.s32.totalorder %s330, %s331
      %p340 = scmp.eq.s32.totalorder %s42, 0
      %p341 = por %p339, %p340
      %p342 = scmp.ne.s32.totalorder %s330, %s331
      %p343 = scmp.eq.s32.totalorder %s43, 1
      %p344 = por %p342, %p343
      %p346 = scmp.ne.s32.totalorder %s331, %s345
      %p347 = scmp.eq.s32.totalorder %s43, 0
      %p348 = por %p346, %p347
      %s350 = sadd.s32 %s349, 1
      %p353 = scmp.eq.s32.totalorder %s37, 1
      %p354 = scmp.ne.s32.totalorder %s349, %s351
      %p355 = scmp.eq.s32.totalorder %s37, 0
      %p356 = por %p354, %p355
      %p357 = scmp.ne.s32.totalorder %s349, %s351
      %p358 = scmp.eq.s32.totalorder %s42, 1
      %p359 = por %p357, %p358
      %p360 = scmp.ne.s32.totalorder %s351, %s352
      %p361 = scmp.eq.s32.totalorder %s42, 0
      %p362 = por %p360, %p361
      %p363 = scmp.ne.s32.totalorder %s351, %s352
      %p364 = scmp.eq.s32.totalorder %s43, 1
      %p365 = por %p363, %p364
      %p367 = scmp.ne.s32.totalorder %s352, %s366
      %p368 = scmp.eq.s32.totalorder %s43, 0
      %p369 = por %p367, %p368
      %s371 = sadd.s32 %s370, 1
      %p374 = scmp.eq.s32.totalorder %s37, 1
      %p375 = scmp.ne.s32.totalorder %s370, %s372
      %p376 = scmp.eq.s32.totalorder %s37, 0
      %p377 = por %p375, %p376
      %p378 = scmp.ne.s32.totalorder %s370, %s372
      %p379 = scmp.eq.s32.totalorder %s42, 1
      %p380 = por %p378, %p379
      %p381 = scmp.ne.s32.totalorder %s372, %s373
      %p382 = scmp.eq.s32.totalorder %s42, 0
      %p383 = por %p381, %p382
      %p384 = scmp.ne.s32.totalorder %s372, %s373
      %p385 = scmp.eq.s32.totalorder %s43, 1
      %p386 = por %p384, %p385
      %p388 = scmp.ne.s32.totalorder %s373, %s387
      %p389 = scmp.eq.s32.totalorder %s43, 0
      %p390 = por %p388, %p389
      %s391 = ssub.s32 %s37, %s44
      %p392 = scmp.eq.s32.totalorder %s391, 0
      %s394 = sadd.s32 %s393, 1
      %s395 = scalar_select %p392, %s393, %s394
      %p398 = pneg %p392
      %p399 = scmp.eq.s32.totalorder %s37, 1
      %p400 = por %p398, %p399
      %p401 = scmp.ne.s32.totalorder %s393, %s396
      %p402 = scmp.eq.s32.totalorder %s37, 0
      %p403 = por %p401, %p402
      %p404 = scmp.ne.s32.totalorder %s393, %s396
      %p405 = scmp.eq.s32.totalorder %s42, 1
      %p406 = por %p404, %p405
      %p407 = scmp.ne.s32.totalorder %s396, %s397
      %p408 = scmp.eq.s32.totalorder %s42, 0
      %p409 = por %p407, %p408
      %p410 = scmp.ne.s32.totalorder %s396, %s397
      %p411 = scmp.eq.s32.totalorder %s43, 1
      %p412 = por %p410, %p411
      %p414 = scmp.ne.s32.totalorder %s397, %s413
      %p415 = scmp.eq.s32.totalorder %s43, 0
      %p416 = por %p414, %p415
      %p417 = scmp.le.s32.totalorder 1, %s37
      %p418 = scmp.lt.s32.totalorder %s37, 3
      %p419 = pnand %p417, %p418
      %p420 = pneg %p419
      // Predicated region
      $region9: #{tpu_custom_call.1} parent=5 // pred_check
        _
      $region10: #{tpu_custom_call.1} parent=5 // pred_check_branch
        %422 = sbr.rel (%p419) target = $region12
      $region11: #{tpu_custom_call.1} parent=5 // pred_region
        %s423 = ssub.s32 %s37, 1
        // Predicated region
        $region13: #{tpu_custom_call.1} parent=11 // pred_check
          %p424 = pneg %p110
        $region14: #{tpu_custom_call.1} parent=11 // pred_check_branch
          %426 = sbr.rel (%p424) target = $region16
        $region15: #{tpu_custom_call.1} parent=11 // pred_region
          %s428 = ssub.s32 1024, 1024
          %429 = vsyncadd [#allocation8], %s428
          %s430 = sshll.u32 [#allocation9], 4
          %s431 = int_to_ptr.vmem [resolvable:$true] %s430
          %436 = dma.hbm_to_vmem [thread:$0]  %s2, 1024, %s431, [#allocation8], 128, 128, 8
        $region16: #{tpu_custom_call.1} parent=11 // pred_fallthru
          _
        // Predicated region
        $region17: #{tpu_custom_call.1} parent=11 // pred_check
          %p437 = pneg %p131
        $region18: #{tpu_custom_call.1} parent=11 // pred_check_branch
          %439 = sbr.rel (%p437) target = $region20
        $region19: #{tpu_custom_call.1} parent=11 // pred_region
          _
        $region20: #{tpu_custom_call.1} parent=11 // pred_fallthru
          _
        // Predicated region
        $region21: #{tpu_custom_call.1} parent=11 // pred_check
          %p440 = pneg %p152
        $region22: #{tpu_custom_call.1} parent=11 // pred_check_branch
          %442 = sbr.rel (%p440) target = $region24
        $region23: #{tpu_custom_call.1} parent=11 // pred_region
          _
        $region24: #{tpu_custom_call.1} parent=11 // pred_fallthru
          _
        // Predicated region
        $region25: #{tpu_custom_call.1} parent=11 // pred_check
          %p443 = pneg %p173
        $region26: #{tpu_custom_call.1} parent=11 // pred_check_branch
          %445 = sbr.rel (%p443) target = $region28
        $region27: #{tpu_custom_call.1} parent=11 // pred_region
          _
        $region28: #{tpu_custom_call.1} parent=11 // pred_fallthru
          _
        // Predicated region
        $region29: #{tpu_custom_call.1} parent=11 // pred_check
          %p446 = pneg %p194
        $region30: #{tpu_custom_call.1} parent=11 // pred_check_branch
          %448 = sbr.rel (%p446) target = $region32
        $region31: #{tpu_custom_call.1} parent=11 // pred_region
          _
        $region32: #{tpu_custom_call.1} parent=11 // pred_fallthru
          _
        // Predicated region
        $region33: #{tpu_custom_call.1} parent=11 // pred_check
          %p449 = pneg %p215
        $region34: #{tpu_custom_call.1} parent=11 // pred_check_branch
          %451 = sbr.rel (%p449) target = $region36
        $region35: #{tpu_custom_call.1} parent=11 // pred_region
          %s453 = ssub.s32 2048, 2048
          %454 = vsyncadd [#allocation11], %s453
          %s455 = sshll.u32 [#allocation10], 4
          %s456 = int_to_ptr.vmem [resolvable:$true] %s455
          %461 = dma.hbm_to_vmem [thread:$0]  %s7, 2048, %s456, [#allocation11], 128, 128, 8
        $region36: #{tpu_custom_call.1} parent=11 // pred_fallthru
          _
        // Predicated region
        $region37: #{tpu_custom_call.1} parent=11 // pred_check
          %p462 = pneg %p236
        $region38: #{tpu_custom_call.1} parent=11 // pred_check_branch
          %464 = sbr.rel (%p462) target = $region40
        $region39: #{tpu_custom_call.1} parent=11 // pred_region
          %s466 = ssub.s32 1024, 1024
          %467 = vsyncadd [#allocation11], %s466
          %s468 = sshll.u32 [#allocation12], 4
          %s469 = int_to_ptr.vmem [resolvable:$true] %s468
          %474 = dma.hbm_to_vmem [thread:$0]  %s8, 1024, %s469, [#allocation11], 128, 128, 8
        $region40: #{tpu_custom_call.1} parent=11 // pred_fallthru
          _
        // Predicated region
        $region41: #{tpu_custom_call.1} parent=11 // pred_check
          %p475 = pneg %p257
        $region42: #{tpu_custom_call.1} parent=11 // pred_check_branch
          %477 = sbr.rel (%p475) target = $region44
        $region43: #{tpu_custom_call.1} parent=11 // pred_region
          _
        $region44: #{tpu_custom_call.1} parent=11 // pred_fallthru
          _
        // Predicated region
        $region45: #{tpu_custom_call.1} parent=11 // pred_check
          %p478 = pneg %p278
        $region46: #{tpu_custom_call.1} parent=11 // pred_check_branch
          %480 = sbr.rel (%p478) target = $region48
        $region47: #{tpu_custom_call.1} parent=11 // pred_region
          _
        $region48: #{tpu_custom_call.1} parent=11 // pred_fallthru
          _
        // Predicated region
        $region49: #{tpu_custom_call.1} parent=11 // pred_check
          %p481 = pneg %p299
        $region50: #{tpu_custom_call.1} parent=11 // pred_check_branch
          %483 = sbr.rel (%p481) target = $region52
        $region51: #{tpu_custom_call.1} parent=11 // pred_region
          _
        $region52: #{tpu_custom_call.1} parent=11 // pred_fallthru
          _
        // Predicated region
        $region53: #{tpu_custom_call.1} parent=11 // pred_check
          %p484 = pneg %p320
        $region54: #{tpu_custom_call.1} parent=11 // pred_check_branch
          %486 = sbr.rel (%p484) target = $region56
        $region55: #{tpu_custom_call.1} parent=11 // pred_region
          _
        $region56: #{tpu_custom_call.1} parent=11 // pred_fallthru
          _
        // Predicated region
        $region57: #{tpu_custom_call.1} parent=11 // pred_check
          %p487 = pneg %p341
        $region58: #{tpu_custom_call.1} parent=11 // pred_check_branch
          %489 = sbr.rel (%p487) target = $region60
        $region59: #{tpu_custom_call.1} parent=11 // pred_region
          %s491 = ssub.s32 2048, 2048
          %492 = vsyncadd [#allocation14], %s491
          %s493 = sshll.u32 [#allocation13], 4
          %s494 = int_to_ptr.vmem [resolvable:$true] %s493
          %499 = dma.hbm_to_vmem [thread:$0]  %s13, 2048, %s494, [#allocation14], 128, 128, 8
        $region60: #{tpu_custom_call.1} parent=11 // pred_fallthru
          _
        // Predicated region
        $region61: #{tpu_custom_call.1} parent=11 // pred_check
          %p500 = pneg %p362
        $region62: #{tpu_custom_call.1} parent=11 // pred_check_branch
          %502 = sbr.rel (%p500) target = $region64
        $region63: #{tpu_custom_call.1} parent=11 // pred_region
          %s504 = ssub.s32 1024, 1024
          %505 = vsyncadd [#allocation14], %s504
          %s506 = sshll.u32 [#allocation15], 4
          %s507 = int_to_ptr.vmem [resolvable:$true] %s506
          %512 = dma.hbm_to_vmem [thread:$0]  %s14, 1024, %s507, [#allocation14], 128, 128, 8
        $region64: #{tpu_custom_call.1} parent=11 // pred_fallthru
          _
        // Predicated region
        $region65: #{tpu_custom_call.1} parent=11 // pred_check
          %p513 = pneg %p383
        $region66: #{tpu_custom_call.1} parent=11 // pred_check_branch
          %515 = sbr.rel (%p513) target = $region68
        $region67: #{tpu_custom_call.1} parent=11 // pred_region
          _
        $region68: #{tpu_custom_call.1} parent=11 // pred_fallthru
          _
      $region12: #{tpu_custom_call.1} parent=5 // pred_fallthru
        _
      %p516 = scmp.lt.s32.totalorder %s37, 2
      // Predicated region
      $region69: #{tpu_custom_call.1} parent=5 // pred_check
        %p517 = pneg %p516
      $region70: #{tpu_custom_call.1} parent=5 // pred_check_branch
        %519 = sbr.rel (%p517) target = $region72
      $region71: #{tpu_custom_call.1} parent=5 // pred_region
        // Predicated region
        $region73: #{tpu_custom_call.1} parent=71 // pred_check
          %p520 = pneg %p57
        $region74: #{tpu_custom_call.1} parent=71 // pred_check_branch
          %522 = sbr.rel (%p520) target = $region76
        $region75: #{tpu_custom_call.1} parent=71 // pred_region
          %s523 = sand.u32 %s47, 1
          %s524 = scalar_lea.sflag [#allocation5], %s523
          %s525 = sand.u32 %s47, 1
          %s526 = smul.addr %s525, 8
          %s527 = scalar_lea.vmem [#allocation4], %s526
          %s529 = ssub.s32 128, 128
          %530 = vsyncadd %s524, %s529
          %s531 = smul.addr %s37, 128
          %s532 = scalar_lea.hbm %s0, %s531
          %s534 = sshll.u32 %s527, 4
          %s535 = int_to_ptr.vmem [resolvable:$true] %s534
          %537 = dma.hbm_to_vmem [thread:$0]  %s532, 128, %s535, %s524
        $region76: #{tpu_custom_call.1} parent=71 // pred_fallthru
          _
        // Predicated region
        $region77: #{tpu_custom_call.1} parent=71 // pred_check
          %p538 = pneg %p83
        $region78: #{tpu_custom_call.1} parent=71 // pred_check_branch
          %540 = sbr.rel (%p538) target = $region80
        $region79: #{tpu_custom_call.1} parent=71 // pred_region
          %s541 = sand.u32 %s37, 1
          %s542 = scalar_lea.sflag [#allocation8], %s541
          %s543 = sand.u32 %s73, 1
          %s544 = smul.addr %s543, 8
          %s545 = scalar_lea.vmem [#allocation7], %s544
          %s547 = ssub.s32 128, 128
          %548 = vsyncadd %s542, %s547
          %s549 = smul.addr %s37, 128
          %s550 = scalar_lea.hbm %s1, %s549
          %s552 = sshll.u32 %s545, 4
          %s553 = int_to_ptr.vmem [resolvable:$true] %s552
          %555 = dma.hbm_to_vmem [thread:$0]  %s550, 128, %s553, %s542
        $region80: #{tpu_custom_call.1} parent=71 // pred_fallthru
          _
      $region72: #{tpu_custom_call.1} parent=5 // pred_fallthru
        _
      %p556 = scmp.le.s32.totalorder 1, %s37
      %p557 = scmp.lt.s32.totalorder %s37, 3
      %p558 = pnand %p556, %p557
      %p559 = pneg %p558
      // Predicated region
      $region81: #{tpu_custom_call.1} parent=5 // pred_check
        _
      $region82: #{tpu_custom_call.1} parent=5 // pred_check_branch
        %561 = sbr.rel (%p558) target = $region84
      $region83: #{tpu_custom_call.1} parent=5 // pred_region
        %s562 = ssub.s32 %s37, 1
        %s563 = sand.u32 %s50, 1
        %s564 = scalar_lea.sflag [#allocation5], %s563
        %s565 = sand.u32 %s50, 1
        %s566 = smul.addr %s565, 8
        %s567 = scalar_lea.vmem [#allocation4], %s566
        // Predicated region
        $region85: #{tpu_custom_call.1} parent=83 // pred_check
          %p568 = pneg %p63
        $region86: #{tpu_custom_call.1} parent=83 // pred_check_branch
          %570 = sbr.rel (%p568) target = $region88
        $region87: #{tpu_custom_call.1} parent=83 // pred_region
          %571 = dma.done %s564, 128
        $region88: #{tpu_custom_call.1} parent=83 // pred_fallthru
          _
        %s572 = sand.u32 %s42, 1
        %s573 = scalar_lea.sflag [#allocation8], %s572
        %s574 = sand.u32 %s76, 1
        %s575 = smul.addr %s574, 8
        %s576 = scalar_lea.vmem [#allocation7], %s575
        // Predicated region
        $region89: #{tpu_custom_call.1} parent=83 // pred_check
          %p577 = pneg %p89
        $region90: #{tpu_custom_call.1} parent=83 // pred_check_branch
          %579 = sbr.rel (%p577) target = $region92
        $region91: #{tpu_custom_call.1} parent=83 // pred_region
          %580 = dma.done %s573, 128
        $region92: #{tpu_custom_call.1} parent=83 // pred_fallthru
          _
        // Predicated region
        $region93: #{tpu_custom_call.1} parent=83 // pred_check
          %p581 = pneg %p110
        $region94: #{tpu_custom_call.1} parent=83 // pred_check_branch
          %583 = sbr.rel (%p581) target = $region96
        $region95: #{tpu_custom_call.1} parent=83 // pred_region
          %584 = dma.done [#allocation8], 1024
        $region96: #{tpu_custom_call.1} parent=83 // pred_fallthru
          _
        // Predicated region
        $region97: #{tpu_custom_call.1} parent=83 // pred_check
          %p585 = pneg %p215
        $region98: #{tpu_custom_call.1} parent=83 // pred_check_branch
          %587 = sbr.rel (%p585) target = $region100
        $region99: #{tpu_custom_call.1} parent=83 // pred_region
          %588 = dma.done [#allocation11], 2048
        $region100: #{tpu_custom_call.1} parent=83 // pred_fallthru
          _
        // Predicated region
        $region101: #{tpu_custom_call.1} parent=83 // pred_check
          %p589 = pneg %p236
        $region102: #{tpu_custom_call.1} parent=83 // pred_check_branch
          %591 = sbr.rel (%p589) target = $region104
        $region103: #{tpu_custom_call.1} parent=83 // pred_region
          %592 = dma.done [#allocation11], 1024
        $region104: #{tpu_custom_call.1} parent=83 // pred_fallthru
          _
        // Predicated region
        $region105: #{tpu_custom_call.1} parent=83 // pred_check
          %p593 = pneg %p341
        $region106: #{tpu_custom_call.1} parent=83 // pred_check_branch
          %595 = sbr.rel (%p593) target = $region108
        $region107: #{tpu_custom_call.1} parent=83 // pred_region
          %596 = dma.done [#allocation14], 2048
        $region108: #{tpu_custom_call.1} parent=83 // pred_fallthru
          _
        // Predicated region
        $region109: #{tpu_custom_call.1} parent=83 // pred_check
          %p597 = pneg %p362
        $region110: #{tpu_custom_call.1} parent=83 // pred_check_branch
          %599 = sbr.rel (%p597) target = $region112
        $region111: #{tpu_custom_call.1} parent=83 // pred_region
          %600 = dma.done [#allocation14], 1024
        $region112: #{tpu_custom_call.1} parent=83 // pred_fallthru
          _
        %s601 = sand.u32 %s50, 1
        %s602 = scalar_lea.sflag [#allocation5], %s601
        %s603 = sand.u32 %s50, 1
        %s604 = smul.addr %s603, 8
        %s605 = scalar_lea.vmem [#allocation4], %s604
        %p606 = pneg %p63
        %p607 = pneg %p60
        %s608 = sand.u32 %s42, 1
        %s609 = scalar_lea.sflag [#allocation8], %s608
        %s610 = sand.u32 %s76, 1
        %s611 = smul.addr %s610, 8
        %s612 = scalar_lea.vmem [#allocation7], %s611
        %p613 = pneg %p89
        %p614 = pneg %p86
        %p615 = pneg %p110
        %p616 = pneg %p107
        %p617 = pneg %p131
        %p618 = pneg %p128
        %p619 = pneg %p152
        %p620 = pneg %p149
        %p621 = pneg %p173
        %p622 = pneg %p170
        %p623 = pneg %p194
        %p624 = pneg %p191
        %p625 = pneg %p215
        %p626 = pneg %p212
        %p627 = pneg %p236
        %p628 = pneg %p233
        %p629 = pneg %p257
        %p630 = pneg %p254
        %p631 = pneg %p278
        %p632 = pneg %p275
        %p633 = pneg %p299
        %p634 = pneg %p296
        %p635 = pneg %p320
        %p636 = pneg %p317
        %p637 = pneg %p341
        %p638 = pneg %p338
        %p639 = pneg %p362
        %p640 = pneg %p359
        %p641 = pneg %p383
        %p642 = pneg %p380
        %p643 = pneg %p409
        %p644 = pneg %p406
        %s645 = sand.u32 %s396, 1
        %s646 = scalar_lea.sflag [#allocation6], %s645
        %s647 = sand.u32 %s396, 1
        %s648 = smul.addr %s647, 8
        %s649 = scalar_lea.vmem [#allocation16], %s648
        %v650 = vld [vmem:[%s576] sm:$0xff]
        %v651 = vld [vmem:[%s567] sm:$0xff]
        %v652 = vld [vmem:[#allocation9] sm:$0xff]
        %v653 = vld [vmem:[#allocation9 + $0x8] sm:$0xff]
        %v654 = vld [vmem:[#allocation9 + $0x10] sm:$0xff]
        %v655 = vld [vmem:[#allocation9 + $0x18] sm:$0xff]
        %v656 = vld [vmem:[#allocation9 + $0x20] sm:$0xff]
        %v657 = vld [vmem:[#allocation9 + $0x28] sm:$0xff]
        %v658 = vld [vmem:[#allocation9 + $0x30] sm:$0xff]
        %v659 = vld [vmem:[#allocation9 + $0x38] sm:$0xff]
        %v660 = vld [vmem:[%s3] sm:$0x1]
        %v662 = vlaneseq
        %v663 = vshrl.u32 %v662, 7
        %v664 = vsub.s32 0, %v663
        %v665 = vrot.slane %v660, %v664
        %vm667 = vcmask 523264
        %v669 = vsel %vm667, %v651, 0
        %671 = vmatprep.subr.mxu0 0.0
        %672 = vmatpush1.msra.mxu0 %v652
        %673 = vmatprep.subr.mxu0 0.0
        %674 = vmatpush1.msra.mxu0 %v653
        %675 = vmatprep.subr.mxu0 0.0
        %676 = vmatpush1.msra.mxu0 %v654
        %677 = vmatprep.subr.mxu0 0.0
        %678 = vmatpush1.msra.mxu0 %v655
        %679 = vmatprep.subr.mxu0 0.0
        %680 = vmatpush1.msra.mxu0 %v656
        %681 = vmatprep.subr.mxu0 0.0
        %682 = vmatpush1.msra.mxu0 %v657
        %683 = vmatprep.subr.mxu0 0.0
        %684 = vmatpush1.msra.mxu0 %v658
        %685 = vmatprep.subr.mxu0 0.0
        %686 = vmatpush1.msra.mxu0 %v659
        %687 = vmatprep.subr.mxu0 0.0
        %688 = vmatpush1.msra.mxu0 0.0
        %689 = vmatprep.subr.mxu0 0.0
        %690 = vmatpush1.msra.mxu0 0.0
        %691 = vmatprep.subr.mxu0 0.0
        %692 = vmatpush1.msra.mxu0 0.0
        %693 = vmatprep.subr.mxu0 0.0
        %694 = vmatpush1.msra.mxu0 0.0
        %695 = vmatprep.subr.mxu0 0.0
        %696 = vmatpush1.msra.mxu0 0.0
        %697 = vmatprep.subr.mxu0 0.0
        %698 = vmatpush1.msra.mxu0 0.0
        %699 = vmatprep.subr.mxu0 0.0
        %700 = vmatpush1.msra.mxu0 0.0
        %701 = vmatprep.subr.mxu0 0.0
        %702 = vmatpush1.msra.mxu0 0.0
        %703 = vmatprep.subr.mxu0 0.0
        %704 = vmatpush1.msra.mxu0 0.0
        %705 = vmatprep.subr.mxu0 0.0
        %706 = vmatpush1.msra.mxu0 0.0
        %707 = vmatprep.subr.mxu0 0.0
        %708 = vmatpush1.msra.mxu0 0.0
        %709 = vmatprep.subr.mxu0 0.0
        %710 = vmatpush1.msra.mxu0 0.0
        %711 = vmatprep.subr.mxu0 0.0
        %712 = vmatpush1.msra.mxu0 0.0
        %713 = vmatprep.subr.mxu0 0.0
        %714 = vmatpush1.msra.mxu0 0.0
        %715 = vmatprep.subr.mxu0 0.0
        %716 = vmatpush1.msra.mxu0 0.0
        %717 = vmatprep.subr.mxu0 0.0
        %718 = vmatpush1.msra.mxu0 0.0
        %719 = vmatprep.subr.mxu0 0.0
        %720 = vmatpush1.msra.mxu0 0.0
        %721 = vmatprep.subr.mxu0 0.0
        %722 = vmatpush1.msra.mxu0 0.0
        %723 = vmatprep.subr.mxu0 0.0
        %724 = vmatpush1.msra.mxu0 0.0
        %725 = vmatprep.subr.mxu0 0.0
        %726 = vmatpush1.msra.mxu0 0.0
        %727 = vmatprep.subr.mxu0 0.0
        %728 = vmatpush1.msra.mxu0 0.0
        %729 = vmatprep.subr.mxu0 0.0
        %730 = vmatpush1.msra.mxu0 0.0
        %731 = vmatprep.subr.mxu0 0.0
        %732 = vmatpush1.msra.mxu0 0.0
        %733 = vmatprep.subr.mxu0 0.0
        %734 = vmatpush1.msra.mxu0 0.0
        %735 = vmatprep.mubr.f32.mxu0 0.0
        %736 = vmatmul.mubr.f32.gmra.mrb[0].mxu0 %v669
        %v737 = vpop.f32.mrb[0].mxu0
        %v738 = vadd.f32 %v665, %v737
        %v739 = vpop.f32.mrb[0].mxu0
        %740 = vdwg.mxu0
        %741 = vadd.xlane.f32.xlu0 %v738
        %v742 = vpop.xlane.xlu0 %741
        %v743 = vrcp.pop 128.0
        %v744 = vmul.f32 %v742, %v743
        %v745 = vsub.f32 %v738, %v744
        %v746 = vmul.f32 %v745, %v745
        %747 = vadd.xlane.f32.xlu0 %v746
        %v748 = vpop.xlane.xlu0 %747
        %v749 = vmul.f32 %v748, %v743
        %v750 = vadd.f32 %v749, 1e-05
        %v751 = vrsqrt.pop %v750
        %v752 = vmul.f32 %v745, %v751
        %v753 = vld [vmem:[%s4] sm:$0x1]
        %v755 = vlaneseq
        %v756 = vshrl.u32 %v755, 7
        %v757 = vsub.s32 0, %v756
        %v758 = vrot.slane %v753, %v757
        %v760 = vmul.f32 %v752, %v758
        %v761 = vld [vmem:[%s5] sm:$0x1]
        %v763 = vlaneseq
        %v764 = vshrl.u32 %v763, 7
        %v765 = vsub.s32 0, %v764
        %v766 = vrot.slane %v761, %v765
        %v768 = vadd.f32 %v760, %v766
        %vm769 = vcmp.gt.f32.partialorder %v768, 0.0
        %v770 = vld [vmem:[#allocation2] sm:$0x1]
        %v772 = vlaneseq
        %v773 = vshrl.u32 %v772, 7
        %v774 = vsub.s32 0, %v773
        %v775 = vrot.slane %v770, %v774
        %776 = vset.pattern.permute.xlu0 0
        %777 = vperm.xlu0 %776, %v775
        %v778 = vpop.permute.xlu0 %777
        %v780 = vmul.f32 %v778, %v768
        %v781 = vsel %vm769, %v768, %v780
        %v782 = vld [vmem:[#allocation10] sm:$0xff]
        %v783 = vld [vmem:[#allocation10 + $0x8] sm:$0xff]
        %v784 = vld [vmem:[#allocation10 + $0x10] sm:$0xff]
        %v785 = vld [vmem:[#allocation10 + $0x18] sm:$0xff]
        %v786 = vld [vmem:[#allocation10 + $0x20] sm:$0xff]
        %v787 = vld [vmem:[#allocation10 + $0x28] sm:$0xff]
        %v788 = vld [vmem:[#allocation10 + $0x30] sm:$0xff]
        %v789 = vld [vmem:[#allocation10 + $0x38] sm:$0xff]
        %v790 = vld [vmem:[#allocation10 + $0x40] sm:$0xff]
        %v791 = vld [vmem:[#allocation10 + $0x48] sm:$0xff]
        %v792 = vld [vmem:[#allocation10 + $0x50] sm:$0xff]
        %v793 = vld [vmem:[#allocation10 + $0x58] sm:$0xff]
        %v794 = vld [vmem:[#allocation10 + $0x60] sm:$0xff]
        %v795 = vld [vmem:[#allocation10 + $0x68] sm:$0xff]
        %v796 = vld [vmem:[#allocation10 + $0x70] sm:$0xff]
        %v797 = vld [vmem:[#allocation10 + $0x78] sm:$0xff]
        %v798 = vld [vmem:[#allocation12] sm:$0xff]
        %v799 = vld [vmem:[#allocation12 + $0x8] sm:$0xff]
        %v800 = vld [vmem:[#allocation12 + $0x10] sm:$0xff]
        %v801 = vld [vmem:[#allocation12 + $0x18] sm:$0xff]
        %v802 = vld [vmem:[#allocation12 + $0x20] sm:$0xff]
        %v803 = vld [vmem:[#allocation12 + $0x28] sm:$0xff]
        %v804 = vld [vmem:[#allocation12 + $0x30] sm:$0xff]
        %v805 = vld [vmem:[#allocation12 + $0x38] sm:$0xff]
        %v807 = vsel %vm667, %v650, 0
        %809 = vmatprep.subr.mxu0 0.0
        %810 = vmatpush1.msra.mxu0 %v798
        %811 = vmatprep.subr.mxu0 0.0
        %812 = vmatpush1.msra.mxu0 %v799
        %813 = vmatprep.subr.mxu0 0.0
        %814 = vmatpush1.msra.mxu0 %v800
        %815 = vmatprep.subr.mxu0 0.0
        %816 = vmatpush1.msra.mxu0 %v801
        %817 = vmatprep.subr.mxu0 0.0
        %818 = vmatpush1.msra.mxu0 %v802
        %819 = vmatprep.subr.mxu0 0.0
        %820 = vmatpush1.msra.mxu0 %v803
        %821 = vmatprep.subr.mxu0 0.0
        %822 = vmatpush1.msra.mxu0 %v804
        %823 = vmatprep.subr.mxu0 0.0
        %824 = vmatpush1.msra.mxu0 %v805
        %825 = vmatprep.subr.mxu0 0.0
        %826 = vmatpush1.msra.mxu0 0.0
        %827 = vmatprep.subr.mxu0 0.0
        %828 = vmatpush1.msra.mxu0 0.0
        %829 = vmatprep.subr.mxu0 0.0
        %830 = vmatpush1.msra.mxu0 0.0
        %831 = vmatprep.subr.mxu0 0.0
        %832 = vmatpush1.msra.mxu0 0.0
        %833 = vmatprep.subr.mxu0 0.0
        %834 = vmatpush1.msra.mxu0 0.0
        %835 = vmatprep.subr.mxu0 0.0
        %836 = vmatpush1.msra.mxu0 0.0
        %837 = vmatprep.subr.mxu0 0.0
        %838 = vmatpush1.msra.mxu0 0.0
        %839 = vmatprep.subr.mxu0 0.0
        %840 = vmatpush1.msra.mxu0 0.0
        %841 = vmatprep.subr.mxu0 0.0
        %842 = vmatpush1.msra.mxu0 0.0
        %843 = vmatprep.subr.mxu0 0.0
        %844 = vmatpush1.msra.mxu0 0.0
        %845 = vmatprep.subr.mxu0 0.0
        %846 = vmatpush1.msra.mxu0 0.0
        %847 = vmatprep.subr.mxu0 0.0
        %848 = vmatpush1.msra.mxu0 0.0
        %849 = vmatprep.subr.mxu0 0.0
        %850 = vmatpush1.msra.mxu0 0.0
        %851 = vmatprep.subr.mxu0 0.0
        %852 = vmatpush1.msra.mxu0 0.0
        %853 = vmatprep.subr.mxu0 0.0
        %854 = vmatpush1.msra.mxu0 0.0
        %855 = vmatprep.subr.mxu0 0.0
        %856 = vmatpush1.msra.mxu0 0.0
        %857 = vmatprep.subr.mxu0 0.0
        %858 = vmatpush1.msra.mxu0 0.0
        %859 = vmatprep.subr.mxu0 0.0
        %860 = vmatpush1.msra.mxu0 0.0
        %861 = vmatprep.subr.mxu0 0.0
        %862 = vmatpush1.msra.mxu0 0.0
        %863 = vmatprep.subr.mxu0 0.0
        %864 = vmatpush1.msra.mxu0 0.0
        %865 = vmatprep.subr.mxu0 0.0
        %866 = vmatpush1.msra.mxu0 0.0
        %867 = vmatprep.subr.mxu0 0.0
        %868 = vmatpush1.msra.mxu0 0.0
        %869 = vmatprep.subr.mxu0 0.0
        %870 = vmatpush1.msra.mxu0 0.0
        %871 = vmatprep.subr.mxu0 0.0
        %872 = vmatpush1.msra.mxu0 0.0
        %873 = vmatprep.mubr.f32.mxu0 0.0
        %874 = vmatmul.mubr.f32.gmra.mrb[0].mxu0 %v807
        %v875 = vpop.f32.mrb[0].mxu0
        %v876 = vadd.f32 0.0, %v875
        %v877 = vpop.f32.mrb[0].mxu0
        %878 = vdwg.mxu0
        %879 = vmatprep.subr.mxu0 0.0
        %880 = vmatpush1.msra.mxu0 %v782
        %881 = vmatprep.subr.mxu0 0.0
        %882 = vmatpush1.msra.mxu0 %v783
        %883 = vmatprep.subr.mxu0 0.0
        %884 = vmatpush1.msra.mxu0 %v784
        %885 = vmatprep.subr.mxu0 0.0
        %886 = vmatpush1.msra.mxu0 %v785
        %887 = vmatprep.subr.mxu0 0.0
        %888 = vmatpush1.msra.mxu0 %v786
        %889 = vmatprep.subr.mxu0 0.0
        %890 = vmatpush1.msra.mxu0 %v787
        %891 = vmatprep.subr.mxu0 0.0
        %892 = vmatpush1.msra.mxu0 %v788
        %893 = vmatprep.subr.mxu0 0.0
        %894 = vmatpush1.msra.mxu0 %v789
        %895 = vmatprep.subr.mxu0 0.0
        %896 = vmatpush1.msra.mxu0 %v790
        %897 = vmatprep.subr.mxu0 0.0
        %898 = vmatpush1.msra.mxu0 %v791
        %899 = vmatprep.subr.mxu0 0.0
        %900 = vmatpush1.msra.mxu0 %v792
        %901 = vmatprep.subr.mxu0 0.0
        %902 = vmatpush1.msra.mxu0 %v793
        %903 = vmatprep.subr.mxu0 0.0
        %904 = vmatpush1.msra.mxu0 %v794
        %905 = vmatprep.subr.mxu0 0.0
        %906 = vmatpush1.msra.mxu0 %v795
        %907 = vmatprep.subr.mxu0 0.0
        %908 = vmatpush1.msra.mxu0 %v796
        %909 = vmatprep.subr.mxu0 0.0
        %910 = vmatpush1.msra.mxu0 %v797
        %911 = vmatprep.subr.mxu0 0.0
        %912 = vmatpush1.msra.mxu0 0.0
        %913 = vmatprep.subr.mxu0 0.0
        %914 = vmatpush1.msra.mxu0 0.0
        %915 = vmatprep.subr.mxu0 0.0
        %916 = vmatpush1.msra.mxu0 0.0
        %917 = vmatprep.subr.mxu0 0.0
        %918 = vmatpush1.msra.mxu0 0.0
        %919 = vmatprep.subr.mxu0 0.0
        %920 = vmatpush1.msra.mxu0 0.0
        %921 = vmatprep.subr.mxu0 0.0
        %922 = vmatpush1.msra.mxu0 0.0
        %923 = vmatprep.subr.mxu0 0.0
        %924 = vmatpush1.msra.mxu0 0.0
        %925 = vmatprep.subr.mxu0 0.0
        %926 = vmatpush1.msra.mxu0 0.0
        %927 = vmatprep.subr.mxu0 0.0
        %928 = vmatpush1.msra.mxu0 0.0
        %929 = vmatprep.subr.mxu0 0.0
        %930 = vmatpush1.msra.mxu0 0.0
        %931 = vmatprep.subr.mxu0 0.0
        %932 = vmatpush1.msra.mxu0 0.0
        %933 = vmatprep.subr.mxu0 0.0
        %934 = vmatpush1.msra.mxu0 0.0
        %935 = vmatprep.subr.mxu0 0.0
        %936 = vmatpush1.msra.mxu0 0.0
        %937 = vmatprep.subr.mxu0 0.0
        %938 = vmatpush1.msra.mxu0 0.0
        %939 = vmatprep.subr.mxu0 0.0
        %940 = vmatpush1.msra.mxu0 0.0
        %941 = vmatprep.subr.mxu0 0.0
        %942 = vmatpush1.msra.mxu0 0.0
        %943 = vmatprep.mubr.f32.mxu0 0.0
        %944 = vmatmul.mubr.f32.gmra.mrb[0].mxu0 %v781
        %v945 = vpop.f32.mrb[0].mxu0
        %v946 = vadd.f32 %v876, %v945
        %v947 = vpop.f32.mrb[0].mxu0
        %948 = vdwg.mxu0
        %v949 = vld [vmem:[%s9] sm:$0x1]
        %v951 = vlaneseq
        %v952 = vshrl.u32 %v951, 7
        %v953 = vsub.s32 0, %v952
        %v954 = vrot.slane %v949, %v953
        %v956 = vadd.f32 %v946, %v954
        %957 = vadd.xlane.f32.xlu0 %v956
        %v958 = vpop.xlane.xlu0 %957
        %v959 = vmul.f32 %v958, %v743
        %v960 = vsub.f32 %v956, %v959
        %v961 = vmul.f32 %v960, %v960
        %962 = vadd.xlane.f32.xlu0 %v961
        %v963 = vpop.xlane.xlu0 %962
        %v964 = vmul.f32 %v963, %v743
        %v965 = vadd.f32 %v964, 1e-05
        %v966 = vrsqrt.pop %v965
        %v967 = vmul.f32 %v960, %v966
        %v968 = vld [vmem:[%s10] sm:$0x1]
        %v970 = vlaneseq
        %v971 = vshrl.u32 %v970, 7
        %v972 = vsub.s32 0, %v971
        %v973 = vrot.slane %v968, %v972
        %v975 = vmul.f32 %v967, %v973
        %v976 = vld [vmem:[%s11] sm:$0x1]
        %v978 = vlaneseq
        %v979 = vshrl.u32 %v978, 7
        %v980 = vsub.s32 0, %v979
        %v981 = vrot.slane %v976, %v980
        %v983 = vadd.f32 %v975, %v981
        %vm984 = vcmp.gt.f32.partialorder %v983, 0.0
        %v985 = vld [vmem:[#allocation3] sm:$0x1]
        %v987 = vlaneseq
        %v988 = vshrl.u32 %v987, 7
        %v989 = vsub.s32 0, %v988
        %v990 = vrot.slane %v985, %v989
        %991 = vset.pattern.permute.xlu0 0
        %992 = vperm.xlu0 %991, %v990
        %v993 = vpop.permute.xlu0 %992
        %v995 = vmul.f32 %v993, %v983
        %v996 = vsel %vm984, %v983, %v995
        %v997 = vadd.f32 %v996, %v781
        %v998 = vld [vmem:[#allocation13] sm:$0xff]
        %v999 = vld [vmem:[#allocation13 + $0x8] sm:$0xff]
        %v1000 = vld [vmem:[#allocation13 + $0x10] sm:$0xff]
        %v1001 = vld [vmem:[#allocation13 + $0x18] sm:$0xff]
        %v1002 = vld [vmem:[#allocation13 + $0x20] sm:$0xff]
        %v1003 = vld [vmem:[#allocation13 + $0x28] sm:$0xff]
        %v1004 = vld [vmem:[#allocation13 + $0x30] sm:$0xff]
        %v1005 = vld [vmem:[#allocation13 + $0x38] sm:$0xff]
        %v1006 = vld [vmem:[#allocation13 + $0x40] sm:$0xff]
        %v1007 = vld [vmem:[#allocation13 + $0x48] sm:$0xff]
        %v1008 = vld [vmem:[#allocation13 + $0x50] sm:$0xff]
        %v1009 = vld [vmem:[#allocation13 + $0x58] sm:$0xff]
        %v1010 = vld [vmem:[#allocation13 + $0x60] sm:$0xff]
        %v1011 = vld [vmem:[#allocation13 + $0x68] sm:$0xff]
        %v1012 = vld [vmem:[#allocation13 + $0x70] sm:$0xff]
        %v1013 = vld [vmem:[#allocation13 + $0x78] sm:$0xff]
        %v1014 = vld [vmem:[#allocation15] sm:$0xff]
        %v1015 = vld [vmem:[#allocation15 + $0x8] sm:$0xff]
        %v1016 = vld [vmem:[#allocation15 + $0x10] sm:$0xff]
        %v1017 = vld [vmem:[#allocation15 + $0x18] sm:$0xff]
        %v1018 = vld [vmem:[#allocation15 + $0x20] sm:$0xff]
        %v1019 = vld [vmem:[#allocation15 + $0x28] sm:$0xff]
        %v1020 = vld [vmem:[#allocation15 + $0x30] sm:$0xff]
        %v1021 = vld [vmem:[#allocation15 + $0x38] sm:$0xff]
        %1022 = vmatprep.subr.mxu0 0.0
        %1023 = vmatpush1.msra.mxu0 %v1014
        %1024 = vmatprep.subr.mxu0 0.0
        %1025 = vmatpush1.msra.mxu0 %v1015
        %1026 = vmatprep.subr.mxu0 0.0
        %1027 = vmatpush1.msra.mxu0 %v1016
        %1028 = vmatprep.subr.mxu0 0.0
        %1029 = vmatpush1.msra.mxu0 %v1017
        %1030 = vmatprep.subr.mxu0 0.0
        %1031 = vmatpush1.msra.mxu0 %v1018
        %1032 = vmatprep.subr.mxu0 0.0
        %1033 = vmatpush1.msra.mxu0 %v1019
        %1034 = vmatprep.subr.mxu0 0.0
        %1035 = vmatpush1.msra.mxu0 %v1020
        %1036 = vmatprep.subr.mxu0 0.0
        %1037 = vmatpush1.msra.mxu0 %v1021
        %1038 = vmatprep.subr.mxu0 0.0
        %1039 = vmatpush1.msra.mxu0 0.0
        %1040 = vmatprep.subr.mxu0 0.0
        %1041 = vmatpush1.msra.mxu0 0.0
        %1042 = vmatprep.subr.mxu0 0.0
        %1043 = vmatpush1.msra.mxu0 0.0
        %1044 = vmatprep.subr.mxu0 0.0
        %1045 = vmatpush1.msra.mxu0 0.0
        %1046 = vmatprep.subr.mxu0 0.0
        %1047 = vmatpush1.msra.mxu0 0.0
        %1048 = vmatprep.subr.mxu0 0.0
        %1049 = vmatpush1.msra.mxu0 0.0
        %1050 = vmatprep.subr.mxu0 0.0
        %1051 = vmatpush1.msra.mxu0 0.0
        %1052 = vmatprep.subr.mxu0 0.0
        %1053 = vmatpush1.msra.mxu0 0.0
        %1054 = vmatprep.subr.mxu0 0.0
        %1055 = vmatpush1.msra.mxu0 0.0
        %1056 = vmatprep.subr.mxu0 0.0
        %1057 = vmatpush1.msra.mxu0 0.0
        %1058 = vmatprep.subr.mxu0 0.0
        %1059 = vmatpush1.msra.mxu0 0.0
        %1060 = vmatprep.subr.mxu0 0.0
        %1061 = vmatpush1.msra.mxu0 0.0
        %1062 = vmatprep.subr.mxu0 0.0
        %1063 = vmatpush1.msra.mxu0 0.0
        %1064 = vmatprep.subr.mxu0 0.0
        %1065 = vmatpush1.msra.mxu0 0.0
        %1066 = vmatprep.subr.mxu0 0.0
        %1067 = vmatpush1.msra.mxu0 0.0
        %1068 = vmatprep.subr.mxu0 0.0
        %1069 = vmatpush1.msra.mxu0 0.0
        %1070 = vmatprep.subr.mxu0 0.0
        %1071 = vmatpush1.msra.mxu0 0.0
        %1072 = vmatprep.subr.mxu0 0.0
        %1073 = vmatpush1.msra.mxu0 0.0
        %1074 = vmatprep.subr.mxu0 0.0
        %1075 = vmatpush1.msra.mxu0 0.0
        %1076 = vmatprep.subr.mxu0 0.0
        %1077 = vmatpush1.msra.mxu0 0.0
        %1078 = vmatprep.subr.mxu0 0.0
        %1079 = vmatpush1.msra.mxu0 0.0
        %1080 = vmatprep.subr.mxu0 0.0
        %1081 = vmatpush1.msra.mxu0 0.0
        %1082 = vmatprep.subr.mxu0 0.0
        %1083 = vmatpush1.msra.mxu0 0.0
        %1084 = vmatprep.subr.mxu0 0.0
        %1085 = vmatpush1.msra.mxu0 0.0
        %1086 = vmatprep.mubr.f32.mxu0 0.0
        %1087 = vmatmul.mubr.f32.gmra.mrb[0].mxu0 %v807
        %v1088 = vpop.f32.mrb[0].mxu0
        %v1089 = vadd.f32 0.0, %v1088
        %v1090 = vpop.f32.mrb[0].mxu0
        %1091 = vdwg.mxu0
        %1092 = vmatprep.subr.mxu0 0.0
        %1093 = vmatpush1.msra.mxu0 %v998
        %1094 = vmatprep.subr.mxu0 0.0
        %1095 = vmatpush1.msra.mxu0 %v999
        %1096 = vmatprep.subr.mxu0 0.0
        %1097 = vmatpush1.msra.mxu0 %v1000
        %1098 = vmatprep.subr.mxu0 0.0
        %1099 = vmatpush1.msra.mxu0 %v1001
        %1100 = vmatprep.subr.mxu0 0.0
        %1101 = vmatpush1.msra.mxu0 %v1002
        %1102 = vmatprep.subr.mxu0 0.0
        %1103 = vmatpush1.msra.mxu0 %v1003
        %1104 = vmatprep.subr.mxu0 0.0
        %1105 = vmatpush1.msra.mxu0 %v1004
        %1106 = vmatprep.subr.mxu0 0.0
        %1107 = vmatpush1.msra.mxu0 %v1005
        %1108 = vmatprep.subr.mxu0 0.0
        %1109 = vmatpush1.msra.mxu0 %v1006
        %1110 = vmatprep.subr.mxu0 0.0
        %1111 = vmatpush1.msra.mxu0 %v1007
        %1112 = vmatprep.subr.mxu0 0.0
        %1113 = vmatpush1.msra.mxu0 %v1008
        %1114 = vmatprep.subr.mxu0 0.0
        %1115 = vmatpush1.msra.mxu0 %v1009
        %1116 = vmatprep.subr.mxu0 0.0
        %1117 = vmatpush1.msra.mxu0 %v1010
        %1118 = vmatprep.subr.mxu0 0.0
        %1119 = vmatpush1.msra.mxu0 %v1011
        %1120 = vmatprep.subr.mxu0 0.0
        %1121 = vmatpush1.msra.mxu0 %v1012
        %1122 = vmatprep.subr.mxu0 0.0
        %1123 = vmatpush1.msra.mxu0 %v1013
        %1124 = vmatprep.subr.mxu0 0.0
        %1125 = vmatpush1.msra.mxu0 0.0
        %1126 = vmatprep.subr.mxu0 0.0
        %1127 = vmatpush1.msra.mxu0 0.0
        %1128 = vmatprep.subr.mxu0 0.0
        %1129 = vmatpush1.msra.mxu0 0.0
        %1130 = vmatprep.subr.mxu0 0.0
        %1131 = vmatpush1.msra.mxu0 0.0
        %1132 = vmatprep.subr.mxu0 0.0
        %1133 = vmatpush1.msra.mxu0 0.0
        %1134 = vmatprep.subr.mxu0 0.0
        %1135 = vmatpush1.msra.mxu0 0.0
        %1136 = vmatprep.subr.mxu0 0.0
        %1137 = vmatpush1.msra.mxu0 0.0
        %1138 = vmatprep.subr.mxu0 0.0
        %1139 = vmatpush1.msra.mxu0 0.0
        %1140 = vmatprep.subr.mxu0 0.0
        %1141 = vmatpush1.msra.mxu0 0.0
        %1142 = vmatprep.subr.mxu0 0.0
        %1143 = vmatpush1.msra.mxu0 0.0
        %1144 = vmatprep.subr.mxu0 0.0
        %1145 = vmatpush1.msra.mxu0 0.0
        %1146 = vmatprep.subr.mxu0 0.0
        %1147 = vmatpush1.msra.mxu0 0.0
        %1148 = vmatprep.subr.mxu0 0.0
        %1149 = vmatpush1.msra.mxu0 0.0
        %1150 = vmatprep.subr.mxu0 0.0
        %1151 = vmatpush1.msra.mxu0 0.0
        %1152 = vmatprep.subr.mxu0 0.0
        %1153 = vmatpush1.msra.mxu0 0.0
        %1154 = vmatprep.subr.mxu0 0.0
        %1155 = vmatpush1.msra.mxu0 0.0
        %1156 = vmatprep.mubr.f32.mxu0 0.0
        %1157 = vmatmul.mubr.f32.gmra.mrb[0].mxu0 %v997
        %v1158 = vpop.f32.mrb[0].mxu0
        %v1159 = vadd.f32 %v1089, %v1158
        %v1160 = vpop.f32.mrb[0].mxu0
        %1161 = vdwg.mxu0
        %v1162 = vld [vmem:[%s15] sm:$0x1]
        %v1164 = vlaneseq
        %v1165 = vshrl.u32 %v1164, 7
        %v1166 = vsub.s32 0, %v1165
        %v1167 = vrot.slane %v1162, %v1166
        %v1169 = vadd.f32 %v1159, %v1167
        %v1170 = vmul.f32 %v1169, %v1169
        %1171 = vadd.xlane.f32.xlu0 %v1170
        %v1172 = vpop.xlane.xlu0 %1171
        %v1173 = vrsqrt.pop %v1172
        %v1174 = vmul.f32 %v1172, %v1173
        %vm1175 = vcmp.eq.f32.partialorder %v1172, inf
        %v1176 = vsel %vm1175, %v1172, %v1174
        %vm1177 = vcmp.eq.f32.partialorder %v1172, 0.0
        %v1178 = vand.u32 %v1172, 2147483648
        %v1179 = vsel %vm1177, %v1178, %v1176
        %v1180 = vmax.f32 %v1179, 1e-12
        %v1181 = vrcp.pop %v1180
        %v1182 = vmul.f32 %v1169, %v1181
        %1183 = vst [vmem:[%s649] sm:$0xff] %v1182
        %s1184 = sand.u32 %s396, 1
        %s1185 = scalar_lea.sflag [#allocation6], %s1184
        %s1186 = sand.u32 %s396, 1
        %s1187 = smul.addr %s1186, 8
        %s1188 = scalar_lea.vmem [#allocation16], %s1187
        // Predicated region
        $region113: #{tpu_custom_call.1} parent=83 // pred_check
          %p1189 = pneg %p406
        $region114: #{tpu_custom_call.1} parent=83 // pred_check_branch
          %1191 = sbr.rel (%p1189) target = $region116
        $region115: #{tpu_custom_call.1} parent=83 // pred_region
          %s1193 = ssub.s32 128, 128
          %1194 = vsyncadd %s1185, %s1193
          %s1195 = smul.addr %s42, 128
          %s1196 = scalar_lea.hbm %s16, %s1195
          %s1198 = sshll.u32 %s1188, 4
          %s1199 = int_to_ptr.vmem [resolvable:$true] %s1198
          %1201 = dma.vmem_to_hbm [thread:$0]  %s1199, 128, %s1196, %s1185
        $region116: #{tpu_custom_call.1} parent=83 // pred_fallthru
          _
      $region84: #{tpu_custom_call.1} parent=5 // pred_fallthru
        _
      %p1202 = scmp.le.s32.totalorder 2, %s37
      // Predicated region
      $region117: #{tpu_custom_call.1} parent=5 // pred_check
        %p1203 = pneg %p1202
      $region118: #{tpu_custom_call.1} parent=5 // pred_check_branch
        %1205 = sbr.rel (%p1203) target = $region120
      $region119: #{tpu_custom_call.1} parent=5 // pred_region
        %s1206 = ssub.s32 %s37, 2
        // Predicated region
        $region121: #{tpu_custom_call.1} parent=119 // pred_check
          %p1207 = pneg %p412
        $region122: #{tpu_custom_call.1} parent=119 // pred_check_branch
          %1209 = sbr.rel (%p1207) target = $region124
        $region123: #{tpu_custom_call.1} parent=119 // pred_region
          %s1210 = sand.u32 %s397, 1
          %s1211 = scalar_lea.sflag [#allocation6], %s1210
          %s1212 = sand.u32 %s397, 1
          %s1213 = smul.addr %s1212, 8
          %s1214 = scalar_lea.vmem [#allocation16], %s1213
          %1215 = dma.done %s1211, 128
        $region124: #{tpu_custom_call.1} parent=119 // pred_fallthru
          _
      $region120: #{tpu_custom_call.1} parent=5 // pred_fallthru
        _
    $region6: #{tpu_custom_call.1} parent=1 // loop_footer
      %s41 = sadd.s32 1, %s37
    $region7: #{tpu_custom_call.1} parent=1 // loop_footer_branch
      %36 = sbr.rel target = $region3
    $region8: #{tpu_custom_call.1} parent=1 // loop_exit
      _
    %1216 = vsyncpa [#allocation5], 1
    %s1217 = scalar_lea.sflag [#allocation5], 1
    %1218 = vsyncpa %s1217, 1
    %1219 = vsyncpa [#allocation8], 1
    %s1220 = scalar_lea.sflag [#allocation8], 1
    %1221 = vsyncpa %s1220, 1
    %1222 = vsyncpa [#allocation11], 1
    %1223 = vsyncpa [#allocation14], 1
    %1224 = vsyncpa [#allocation6], 1
    %s1225 = scalar_lea.sflag [#allocation6], 1
    %1226 = vsyncpa %s1225, 1

</llo_original>
